<compile_context>
chip_gen: v7x
topology: tpu7x:2x2x1
jax: 0.10.0
libtpu: 0.0.40
codegen_flags: <defaults>
</compile_context>

<pallas_src>
import functools

import jax
import jax.numpy as jnp
from jax import lax
from jax.experimental import pallas as pl
from jax.experimental.pallas import tpu as pltpu


# ----------------------- packed weight-slab layout -------------------------- #

def _slab_layout(E, H, L):
    """Row offsets of every pre-transposed/fused weight block inside the single
    packed (rows, W) f32 weight slab.  Block starts are 8-aligned so every
    in-kernel slice is a clean sublane-aligned load."""
    sizes = (
        ("enc_ih", E + 4),   # encoder W_ih^T           (E+4, 4H)   g-cols x2
        ("enc_hh", H),       # encoder W_hh^T           (H,   4H)   g-cols x2
        ("enc_b", 1),        # encoder b_ih + b_hh      (1,   4H)   g-cols x2
        ("head_w", H),       # [W_mu^T | W_logvar^T]    (H,   2L)
        ("head_b", 1),       # [b_mu   | b_logvar]      (1,   2L)
        ("dec_ih", E + L),   # decoder W_ih^T           (E+L, 4H)   g-cols x2
        ("dec_hh", H),       # decoder W_hh^T           (H,   4H)   g-cols x2
        ("dec_b", 1),        # decoder b_ih + b_hh      (1,   4H)   g-cols x2
        ("out_w", H),        # W_out^T                  (H,   4)
        ("out_b", 1),        # b_out                    (1,   4)
    )
    off, o = {}, 0
    for name, n in sizes:
        off[name] = (o, o + n)
        o += ((n + 7) // 8) * 8          # 8-align the next block's start
    return off, o


def prepare_params(params):
    """ONE-TIME weight preprocessing (cache the result; do NOT call per step)."""
    E = params["w_emb"].shape[1]
    H = params["enc_w_hh"].shape[1]
    L = params["w_mu"].shape[0]
    G = 4 * H
    W = max(128, G, 2 * L)               # lane-dense slab / output width
    off, rows = _slab_layout(E, H, L)

    def g2(w_t):
        # Double the g-gate columns (PyTorch gate order i, f, g, o) so the
        # kernel can use tanh(x) = 2*sigmoid(2x) - 1 with a single sigmoid pass.
        return w_t.at[:, 2 * H:3 * H].multiply(2.0)

    blocks = {
        "enc_ih": g2(params["enc_w_ih"].T),
        "enc_hh": g2(params["enc_w_hh"].T),
        "enc_b":  g2((params["enc_b_ih"] + params["enc_b_hh"])[None, :]),
        "head_w": jnp.concatenate([params["w_mu"].T, params["w_lv"].T], axis=1),
        "head_b": jnp.concatenate([params["b_mu"], params["b_lv"]])[None, :],
        "dec_ih": g2(params["dec_w_ih"].T),
        "dec_hh": g2(params["dec_w_hh"].T),
        "dec_b":  g2((params["dec_b_ih"] + params["dec_b_hh"])[None, :]),
        "out_w":  params["w_out"].T,
        "out_b":  params["b_out"][None, :],
    }
    slab = jnp.zeros((rows, W), jnp.float32)
    for name, v in blocks.items():
        r0, _ = off[name]
        slab = slab.at[r0:r0 + v.shape[0], :v.shape[1]].set(v.astype(jnp.float32))

    return dict(slab=slab, w_emb=params["w_emb"].astype(jnp.float32),
                E=E, H=H, L=L, W=W, off=off)


# ----------------------------- kernel -------------------------------------- #

def _gates_to_hc(gates, c, H):
    """LSTM gate math (PyTorch order i, f, g, o) with ONE full-width EUP pass.

    g-gate pre-activations were pre-scaled by 2x in prepare_params, so
    tanh(g) == 2*sigmoid(2g) - 1 is recovered with one VPU post-op."""
    sig = jax.nn.sigmoid(gates)                 # single EUP pass over (B, 4H)
    i = sig[:, 0 * H:1 * H]
    f = sig[:, 1 * H:2 * H]
    g = 2.0 * sig[:, 2 * H:3 * H] - 1.0
    o = sig[:, 3 * H:4 * H]
    c_new = f * c + i * g
    h_new = o * jnp.tanh(c_new)                 # only (B, H) wide
    return h_new, c_new


def handwriting_kernel(T, B, E, H, L, off,
                       seq_ref, char_ref, eps_ref, w_ref,
                       recon_ref, head_ref,
                       h_dec_ref):
    G = 4 * H
    Wl = recon_ref.shape[1]                     # lane-dense output width

    def blk(name, lanes):
        r0, r1 = off[name]
        return w_ref[r0:r1, :lanes]             # static slice of the weight slab

    char_emb = char_ref[...]                                       # (B, E)

    # ---- encoder: loop-invariant input projections (2 matmuls, no concat) ----
    r0, _ = off["enc_ih"]
    w_e_char = w_ref[r0:r0 + E, :G]                                # (E, G)
    w_e_seq = w_ref[r0 + E:r0 + E + 4, :G]                         # (4, G)
    xw_char = (jnp.dot(char_emb, w_e_char, preferred_element_type=jnp.float32)
               + blk("enc_b", G))                                  # (B, G)
    xw_seq = jnp.dot(seq_ref[...], w_e_seq,
                     preferred_element_type=jnp.float32)           # (T*B, G)

    # bf16 MXU operands on the serial recurrence (f32 accumulation).
    w_hh_e = blk("enc_hh", G).astype(jnp.bfloat16)                 # (H, G)

    h = jnp.zeros((B, H), jnp.float32)
    c = jnp.zeros((B, H), jnp.float32)
    for t in range(T):                                             # unrolled
        gates = (xw_seq[t * B:(t + 1) * B, :] + xw_char
                 + jnp.dot(h.astype(jnp.bfloat16), w_hh_e,
                           preferred_element_type=jnp.float32))
        h, c = _gates_to_hc(gates, c, H)

    # ---- fused VAE head (mu | logvar), lane-dense 128-wide store ----
    head = (jnp.dot(h, blk("head_w", Wl), preferred_element_type=jnp.float32)
            + blk("head_b", Wl))                                   # (B, Wl)
    head_ref[...] = head
    mu = head[:, :L]
    logvar = head[:, L:2 * L]
    z = mu + eps_ref[...] * jnp.exp(0.5 * logvar)                  # (B, L)

    # ---- decoder: loop-invariant input projection hoisted out of the loop ----
    r0, _ = off["dec_ih"]
    w_d_char = w_ref[r0:r0 + E, :G]                                # (E, G)
    w_d_z = w_ref[r0 + E:r0 + E + L, :G]                           # (L, G)
    xw_d = (jnp.dot(char_emb, w_d_char, preferred_element_type=jnp.float32)
            + jnp.dot(z, w_d_z, preferred_element_type=jnp.float32)
            + blk("dec_b", G))                                     # (B, G)
    w_hh_d = blk("dec_hh", G).astype(jnp.bfloat16)

    h = jnp.zeros((B, H), jnp.float32)
    c = jnp.zeros((B, H), jnp.float32)
    for t in range(T):                                             # unrolled
        gates = xw_d + jnp.dot(h.astype(jnp.bfloat16), w_hh_d,
                               preferred_element_type=jnp.float32)
        h, c = _gates_to_hc(gates, c, H)
        h_dec_ref[t * B:(t + 1) * B, :] = h

    # ---- output projection: ONE matmul, lane-dense (T*B, 128) store ----
    recon_ref[...] = (jnp.dot(h_dec_ref[...], blk("out_w", Wl),
                              preferred_element_type=jnp.float32)
                      + blk("out_b", Wl))


# ----------------------------- wrapper -------------------------------------- #

def handwriting_forward(prep, char, sequence, eps):
    """Equivalent of HandwritingModel.forward(char, sequence).

    prep is the cached output of prepare_params (weights packed once).
    eps is the N(0,1) noise used by reparameterize (explicit for determinism).
    Returns (recon_sequence (B,T,4), mu (B,L), logvar (B,L))."""
    B, T, F = sequence.shape
    E, H, L, W = prep["E"], prep["H"], prep["L"], prep["W"]

    # Pad batch to the 8-row f32 sublane tile.
    B_pad = max(8, ((B + 7) // 8) * 8)
    pad_b = B_pad - B

    # Per-call activation glue only (no weight prep here).
    char_emb = jnp.pad(prep["w_emb"][char], ((0, pad_b), (0, 0)))        # (Bp, E)
    eps_p = jnp.pad(eps.astype(jnp.float32), ((0, pad_b), (0, 0)))       # (Bp, L)
    seq_tm = jnp.transpose(
        jnp.pad(sequence.astype(jnp.float32), ((0, pad_b), (0, 0), (0, 0))),
        (1, 0, 2)).reshape(T * B_pad, F)                                 # (T*Bp, 4)

    kernel = functools.partial(handwriting_kernel, T, B_pad, E, H, L, prep["off"])
    vmem = lambda: pl.BlockSpec(memory_space=pltpu.MemorySpace.VMEM)

    # TODO(synk): for large batch add a grid over B with
    # dimension_semantics=("parallel",) to use both v7x TensorCores.
    recon_flat, head = pl.pallas_call(
        kernel,
        out_shape=(jax.ShapeDtypeStruct((T * B_pad, W), jnp.float32),   # recon (t-major)
                   jax.ShapeDtypeStruct((B_pad, W), jnp.float32)),      # [mu | logvar]
        in_specs=[vmem(), vmem(), vmem(), vmem()],
        out_specs=(vmem(), vmem()),
        scratch_shapes=[pltpu.VMEM((T * B_pad, H), jnp.float32)],
    )(seq_tm, char_emb, eps_p, prep["slab"])

    recon = jnp.transpose(recon_flat[:, :F].reshape(T, B_pad, F), (1, 0, 2))[:B]
    return recon, head[:B, :L], head[:B, L:2 * L]


# --------------------------- params & reference ----------------------------- #

def init_params(key, vocab, E, H, L):
    ks = jax.random.split(key, 15)

    def u(k, shape, fan_in):
        bound = 1.0 / (fan_in ** 0.5)
        return jax.random.uniform(k, shape, jnp.float32, -bound, bound)

    return dict(
        w_emb=jax.random.normal(ks[0], (vocab, E), jnp.float32),
        enc_w_ih=u(ks[1], (4 * H, E + 4), H),
        enc_w_hh=u(ks[2], (4 * H, H), H),
        enc_b_ih=u(ks[3], (4 * H,), H),
        enc_b_hh=u(ks[4], (4 * H,), H),
        w_mu=u(ks[5], (L, H), H),
        b_mu=u(ks[6], (L,), H),
        w_lv=u(ks[7], (L, H), H),
        b_lv=u(ks[8], (L,), H),
        dec_w_ih=u(ks[9], (4 * H, E + L), H),
        dec_w_hh=u(ks[10], (4 * H, H), H),
        dec_b_ih=u(ks[11], (4 * H,), H),
        dec_b_hh=u(ks[12], (4 * H,), H),
        w_out=u(ks[13], (4, H), H),
        b_out=u(ks[14], (4,), H),
    )


def reference_forward(params, char, sequence, eps):
    """Pure-JAX f32 reference mirroring torch semantics (for validation)."""
    B, T, _ = sequence.shape
    H = params["enc_w_hh"].shape[1]
    char_emb = params["w_emb"][char]
    E = char_emb.shape[1]

    def lstm(inputs_tm, w_ih, w_hh, b_ih, b_hh):
        def step(carry, x):
            h, c = carry
            gates = x @ w_ih.T + h @ w_hh.T + b_ih + b_hh
            i, f, g, o = jnp.split(gates, 4, axis=1)
            i = jax.nn.sigmoid(i); f = jax.nn.sigmoid(f)
            g = jnp.tanh(g); o = jax.nn.sigmoid(o)
            c = f * c + i * g
            h = o * jnp.tanh(c)
            return (h, c), h
        h0 = jnp.zeros((B, H), jnp.float32)
        c0 = jnp.zeros((B, H), jnp.float32)
        (hT, _), hs = lax.scan(step, (h0, c0), inputs_tm)
        return hT, hs

    enc_in = jnp.concatenate(
        [jnp.broadcast_to(char_emb[:, None, :], (B, T, E)), sequence], axis=2)
    h_enc, _ = lstm(jnp.transpose(enc_in, (1, 0, 2)),
                    params["enc_w_ih"], params["enc_w_hh"],
                    params["enc_b_ih"], params["enc_b_hh"])
    mu = h_enc @ params["w_mu"].T + params["b_mu"]
    logvar = h_enc @ params["w_lv"].T + params["b_lv"]
    z = mu + eps * jnp.exp(0.5 * logvar)
    L = z.shape[1]
    dec_in = jnp.concatenate(
        [jnp.broadcast_to(char_emb[:, None, :], (B, T, E)),
         jnp.broadcast_to(z[:, None, :], (B, T, L))], axis=2)
    _, hs = lstm(jnp.transpose(dec_in, (1, 0, 2)),
                 params["dec_w_ih"], params["dec_w_hh"],
                 params["dec_b_ih"], params["dec_b_hh"])
    recon_tm = hs @ params["w_out"].T + params["b_out"]
    return jnp.transpose(recon_tm, (1, 0, 2)), mu, logvar


# --------------------------------- main ------------------------------------- #

if __name__ == "__main__":
    # Small synthetic config: vocab=12, embedding=8, hidden=32, latent=16,
    # batch=2, seq_len=8, stroke features=4 (fixed by the module).
    vocab, E, H, L = 12, 8, 32, 16
    B, T = 2, 8

    key = jax.random.PRNGKey(0)
    kp, kc, ks, ke = jax.random.split(key, 4)
    params = init_params(kp, vocab, E, H, L)
    prep = prepare_params(params)        # one-time weight packing (cache & reuse)

    char = jax.random.randint(kc, (B,), 0, vocab)                  # (B,) int indices
    sequence = jax.random.normal(ks, (B, T, 4), jnp.float32)       # (B, T, 4) strokes
    # TODO(synk): torch.randn_like inside reparameterize is replaced by an
    # explicit eps input so the kernel stays deterministic.
    eps = jax.random.normal(ke, (B, L), jnp.float32)

    fwd = jax.jit(functools.partial(handwriting_forward, prep))
    recon, mu, logvar = jax.block_until_ready(fwd(char, sequence, eps))

    r_ref, m_ref, lv_ref = reference_forward(params, char, sequence, eps)
    assert recon.shape == (B, T, 4) and mu.shape == (B, L) and logvar.shape == (B, L)
    # Tolerance relaxed vs the f32 reference because the recurrent matmuls use
    # bf16 MXU operands (f32 accumulation), per the performance review.
    tol = dict(atol=2e-2, rtol=2e-2)
    assert jnp.allclose(recon, r_ref, **tol)
    assert jnp.allclose(mu, m_ref, **tol)
    assert jnp.allclose(logvar, lv_ref, **tol)

    print("KERNEL_OK")
</pallas_src>

<mosaic_0001>
module attributes {stable_mosaic.version = 11 : i64} {
  func.func @handwriting_kernel(%arg0: memref<64x4xf32, #tpu.memory_space<vmem>>, %arg1: memref<8x8xf32, #tpu.memory_space<vmem>>, %arg2: memref<8x16xf32, #tpu.memory_space<vmem>>, %arg3: memref<200x128xf32, #tpu.memory_space<vmem>>, %arg4: memref<64x128xf32, #tpu.memory_space<vmem>>, %arg5: memref<8x128xf32, #tpu.memory_space<vmem>>, %arg6: memref<64x32xf32, #tpu.memory_space<vmem>>) attributes {dimension_semantics = [], scalar_prefetch = 0 : i64, scratch_operands = 1 : i64, tpu.core_type = #tpu.core_type<tc>} {
    %c0 = arith.constant 0 : index
    %c0_0 = arith.constant 0 : index
    %0 = vector.load %arg1[%c0, %c0_0] : memref<8x8xf32, #tpu.memory_space<vmem>>, vector<8x8xf32>
    %c0_1 = arith.constant 0 : index
    %c0_2 = arith.constant 0 : index
    %1 = vector.load %arg3[%c0_1, %c0_2] : memref<200x128xf32, #tpu.memory_space<vmem>>, vector<8x128xf32>
    %c8 = arith.constant 8 : index
    %c0_3 = arith.constant 0 : index
    %2 = vector.load %arg3[%c8, %c0_3] : memref<200x128xf32, #tpu.memory_space<vmem>>, vector<4x128xf32>
    %cst = arith.constant dense<0.000000e+00> : vector<8x128xf32>
    %3 = tpu.matmul %0, %1, %cst {dimension_numbers = #tpu.dot_dimension_numbers<[1], [0], [0], [1], [0, 0, 1, 1], [], []>} : vector<8x8xf32>, vector<8x128xf32>, vector<8x128xf32> -> vector<8x128xf32>
    %c48 = arith.constant 48 : index
    %c0_4 = arith.constant 0 : index
    %4 = vector.load %arg3[%c48, %c0_4] : memref<200x128xf32, #tpu.memory_space<vmem>>, vector<1x128xf32>
    %5 = vector.broadcast %4 : vector<1x128xf32> to vector<8x128xf32>
    %6 = arith.addf %3, %5 : vector<8x128xf32>
    %c0_5 = arith.constant 0 : index
    %c0_6 = arith.constant 0 : index
    %7 = vector.load %arg0[%c0_5, %c0_6] : memref<64x4xf32, #tpu.memory_space<vmem>>, vector<64x4xf32>
    %cst_7 = arith.constant dense<0.000000e+00> : vector<64x128xf32>
    %8 = tpu.matmul %7, %2, %cst_7 {dimension_numbers = #tpu.dot_dimension_numbers<[1], [0], [0], [1], [0, 0, 1, 1], [], []>} : vector<64x4xf32>, vector<4x128xf32>, vector<64x128xf32> -> vector<64x128xf32>
    %c16 = arith.constant 16 : index
    %c0_8 = arith.constant 0 : index
    %9 = vector.load %arg3[%c16, %c0_8] : memref<200x128xf32, #tpu.memory_space<vmem>>, vector<32x128xf32>
    %10 = arith.truncf %9 : vector<32x128xf32> to vector<32x128xbf16>
    %cst_9 = arith.constant 0.000000e+00 : f32
    %11 = vector.broadcast %cst_9 : f32 to vector<8x32xf32>
    %cst_10 = arith.constant 0.000000e+00 : f32
    %12 = vector.broadcast %cst_10 : f32 to vector<8x32xf32>
    %13 = vector.extract_strided_slice %8 {offsets = [0, 0], sizes = [8, 128], strides = [1, 1]} : vector<64x128xf32> to vector<8x128xf32>
    %14 = arith.addf %13, %6 : vector<8x128xf32>
    %15 = arith.truncf %11 : vector<8x32xf32> to vector<8x32xbf16>
    %cst_11 = arith.constant dense<0.000000e+00> : vector<8x128xf32>
    %16 = tpu.matmul %15, %10, %cst_11 {dimension_numbers = #tpu.dot_dimension_numbers<[1], [0], [0], [1], [0, 0, 1, 1], [], []>} : vector<8x32xbf16>, vector<32x128xbf16>, vector<8x128xf32> -> vector<8x128xf32>
    %17 = arith.addf %14, %16 : vector<8x128xf32>
    %18 = arith.negf %17 : vector<8x128xf32>
    %19 = math.exp %18 : vector<8x128xf32>
    %cst_12 = arith.constant 1.000000e+00 : f32
    %20 = vector.broadcast %cst_12 : f32 to vector<8x128xf32>
    %21 = arith.addf %20, %19 : vector<8x128xf32>
    %22 = arith.divf %20, %21 : vector<8x128xf32>
    %23 = vector.extract_strided_slice %22 {offsets = [0, 0], sizes = [8, 32], strides = [1, 1]} : vector<8x128xf32> to vector<8x32xf32>
    %24 = vector.extract_strided_slice %22 {offsets = [0, 32], sizes = [8, 32], strides = [1, 1]} : vector<8x128xf32> to vector<8x32xf32>
    %25 = vector.extract_strided_slice %22 {offsets = [0, 64], sizes = [8, 32], strides = [1, 1]} : vector<8x128xf32> to vector<8x32xf32>
    %cst_13 = arith.constant 2.000000e+00 : f32
    %26 = vector.broadcast %cst_13 : f32 to vector<8x32xf32>
    %27 = arith.mulf %26, %25 : vector<8x32xf32>
    %cst_14 = arith.constant 1.000000e+00 : f32
    %28 = vector.broadcast %cst_14 : f32 to vector<8x32xf32>
    %29 = arith.subf %27, %28 : vector<8x32xf32>
    %30 = vector.extract_strided_slice %22 {offsets = [0, 96], sizes = [8, 32], strides = [1, 1]} : vector<8x128xf32> to vector<8x32xf32>
    %31 = arith.mulf %24, %12 : vector<8x32xf32>
    %32 = arith.mulf %23, %29 : vector<8x32xf32>
    %33 = arith.addf %31, %32 : vector<8x32xf32>
    %34 = math.tanh %33 : vector<8x32xf32>
    %35 = arith.mulf %30, %34 : vector<8x32xf32>
    %36 = vector.extract_strided_slice %8 {offsets = [8, 0], sizes = [8, 128], strides = [1, 1]} : vector<64x128xf32> to vector<8x128xf32>
    %37 = arith.addf %36, %6 : vector<8x128xf32>
    %38 = arith.truncf %35 : vector<8x32xf32> to vector<8x32xbf16>
    %cst_15 = arith.constant dense<0.000000e+00> : vector<8x128xf32>
    %39 = tpu.matmul %38, %10, %cst_15 {dimension_numbers = #tpu.dot_dimension_numbers<[1], [0], [0], [1], [0, 0, 1, 1], [], []>} : vector<8x32xbf16>, vector<32x128xbf16>, vector<8x128xf32> -> vector<8x128xf32>
    %40 = arith.addf %37, %39 : vector<8x128xf32>
    %41 = arith.negf %40 : vector<8x128xf32>
    %42 = math.exp %41 : vector<8x128xf32>
    %cst_16 = arith.constant 1.000000e+00 : f32
    %43 = vector.broadcast %cst_16 : f32 to vector<8x128xf32>
    %44 = arith.addf %43, %42 : vector<8x128xf32>
    %45 = arith.divf %43, %44 : vector<8x128xf32>
    %46 = vector.extract_strided_slice %45 {offsets = [0, 0], sizes = [8, 32], strides = [1, 1]} : vector<8x128xf32> to vector<8x32xf32>
    %47 = vector.extract_strided_slice %45 {offsets = [0, 32], sizes = [8, 32], strides = [1, 1]} : vector<8x128xf32> to vector<8x32xf32>
    %48 = vector.extract_strided_slice %45 {offsets = [0, 64], sizes = [8, 32], strides = [1, 1]} : vector<8x128xf32> to vector<8x32xf32>
    %cst_17 = arith.constant 2.000000e+00 : f32
    %49 = vector.broadcast %cst_17 : f32 to vector<8x32xf32>
    %50 = arith.mulf %49, %48 : vector<8x32xf32>
    %cst_18 = arith.constant 1.000000e+00 : f32
    %51 = vector.broadcast %cst_18 : f32 to vector<8x32xf32>
    %52 = arith.subf %50, %51 : vector<8x32xf32>
    %53 = vector.extract_strided_slice %45 {offsets = [0, 96], sizes = [8, 32], strides = [1, 1]} : vector<8x128xf32> to vector<8x32xf32>
    %54 = arith.mulf %47, %33 : vector<8x32xf32>
    %55 = arith.mulf %46, %52 : vector<8x32xf32>
    %56 = arith.addf %54, %55 : vector<8x32xf32>
    %57 = math.tanh %56 : vector<8x32xf32>
    %58 = arith.mulf %53, %57 : vector<8x32xf32>
    %59 = vector.extract_strided_slice %8 {offsets = [16, 0], sizes = [8, 128], strides = [1, 1]} : vector<64x128xf32> to vector<8x128xf32>
    %60 = arith.addf %59, %6 : vector<8x128xf32>
    %61 = arith.truncf %58 : vector<8x32xf32> to vector<8x32xbf16>
    %cst_19 = arith.constant dense<0.000000e+00> : vector<8x128xf32>
    %62 = tpu.matmul %61, %10, %cst_19 {dimension_numbers = #tpu.dot_dimension_numbers<[1], [0], [0], [1], [0, 0, 1, 1], [], []>} : vector<8x32xbf16>, vector<32x128xbf16>, vector<8x128xf32> -> vector<8x128xf32>
    %63 = arith.addf %60, %62 : vector<8x128xf32>
    %64 = arith.negf %63 : vector<8x128xf32>
    %65 = math.exp %64 : vector<8x128xf32>
    %cst_20 = arith.constant 1.000000e+00 : f32
    %66 = vector.broadcast %cst_20 : f32 to vector<8x128xf32>
    %67 = arith.addf %66, %65 : vector<8x128xf32>
    %68 = arith.divf %66, %67 : vector<8x128xf32>
    %69 = vector.extract_strided_slice %68 {offsets = [0, 0], sizes = [8, 32], strides = [1, 1]} : vector<8x128xf32> to vector<8x32xf32>
    %70 = vector.extract_strided_slice %68 {offsets = [0, 32], sizes = [8, 32], strides = [1, 1]} : vector<8x128xf32> to vector<8x32xf32>
    %71 = vector.extract_strided_slice %68 {offsets = [0, 64], sizes = [8, 32], strides = [1, 1]} : vector<8x128xf32> to vector<8x32xf32>
    %cst_21 = arith.constant 2.000000e+00 : f32
    %72 = vector.broadcast %cst_21 : f32 to vector<8x32xf32>
    %73 = arith.mulf %72, %71 : vector<8x32xf32>
    %cst_22 = arith.constant 1.000000e+00 : f32
    %74 = vector.broadcast %cst_22 : f32 to vector<8x32xf32>
    %75 = arith.subf %73, %74 : vector<8x32xf32>
    %76 = vector.extract_strided_slice %68 {offsets = [0, 96], sizes = [8, 32], strides = [1, 1]} : vector<8x128xf32> to vector<8x32xf32>
    %77 = arith.mulf %70, %56 : vector<8x32xf32>
    %78 = arith.mulf %69, %75 : vector<8x32xf32>
    %79 = arith.addf %77, %78 : vector<8x32xf32>
    %80 = math.tanh %79 : vector<8x32xf32>
    %81 = arith.mulf %76, %80 : vector<8x32xf32>
    %82 = vector.extract_strided_slice %8 {offsets = [24, 0], sizes = [8, 128], strides = [1, 1]} : vector<64x128xf32> to vector<8x128xf32>
    %83 = arith.addf %82, %6 : vector<8x128xf32>
    %84 = arith.truncf %81 : vector<8x32xf32> to vector<8x32xbf16>
    %cst_23 = arith.constant dense<0.000000e+00> : vector<8x128xf32>
    %85 = tpu.matmul %84, %10, %cst_23 {dimension_numbers = #tpu.dot_dimension_numbers<[1], [0], [0], [1], [0, 0, 1, 1], [], []>} : vector<8x32xbf16>, vector<32x128xbf16>, vector<8x128xf32> -> vector<8x128xf32>
    %86 = arith.addf %83, %85 : vector<8x128xf32>
    %87 = arith.negf %86 : vector<8x128xf32>
    %88 = math.exp %87 : vector<8x128xf32>
    %cst_24 = arith.constant 1.000000e+00 : f32
    %89 = vector.broadcast %cst_24 : f32 to vector<8x128xf32>
    %90 = arith.addf %89, %88 : vector<8x128xf32>
    %91 = arith.divf %89, %90 : vector<8x128xf32>
    %92 = vector.extract_strided_slice %91 {offsets = [0, 0], sizes = [8, 32], strides = [1, 1]} : vector<8x128xf32> to vector<8x32xf32>
    %93 = vector.extract_strided_slice %91 {offsets = [0, 32], sizes = [8, 32], strides = [1, 1]} : vector<8x128xf32> to vector<8x32xf32>
    %94 = vector.extract_strided_slice %91 {offsets = [0, 64], sizes = [8, 32], strides = [1, 1]} : vector<8x128xf32> to vector<8x32xf32>
    %cst_25 = arith.constant 2.000000e+00 : f32
    %95 = vector.broadcast %cst_25 : f32 to vector<8x32xf32>
    %96 = arith.mulf %95, %94 : vector<8x32xf32>
    %cst_26 = arith.constant 1.000000e+00 : f32
    %97 = vector.broadcast %cst_26 : f32 to vector<8x32xf32>
    %98 = arith.subf %96, %97 : vector<8x32xf32>
    %99 = vector.extract_strided_slice %91 {offsets = [0, 96], sizes = [8, 32], strides = [1, 1]} : vector<8x128xf32> to vector<8x32xf32>
    %100 = arith.mulf %93, %79 : vector<8x32xf32>
    %101 = arith.mulf %92, %98 : vector<8x32xf32>
    %102 = arith.addf %100, %101 : vector<8x32xf32>
    %103 = math.tanh %102 : vector<8x32xf32>
    %104 = arith.mulf %99, %103 : vector<8x32xf32>
    %105 = vector.extract_strided_slice %8 {offsets = [32, 0], sizes = [8, 128], strides = [1, 1]} : vector<64x128xf32> to vector<8x128xf32>
    %106 = arith.addf %105, %6 : vector<8x128xf32>
    %107 = arith.truncf %104 : vector<8x32xf32> to vector<8x32xbf16>
    %cst_27 = arith.constant dense<0.000000e+00> : vector<8x128xf32>
    %108 = tpu.matmul %107, %10, %cst_27 {dimension_numbers = #tpu.dot_dimension_numbers<[1], [0], [0], [1], [0, 0, 1, 1], [], []>} : vector<8x32xbf16>, vector<32x128xbf16>, vector<8x128xf32> -> vector<8x128xf32>
    %109 = arith.addf %106, %108 : vector<8x128xf32>
    %110 = arith.negf %109 : vector<8x128xf32>
    %111 = math.exp %110 : vector<8x128xf32>
    %cst_28 = arith.constant 1.000000e+00 : f32
    %112 = vector.broadcast %cst_28 : f32 to vector<8x128xf32>
    %113 = arith.addf %112, %111 : vector<8x128xf32>
    %114 = arith.divf %112, %113 : vector<8x128xf32>
    %115 = vector.extract_strided_slice %114 {offsets = [0, 0], sizes = [8, 32], strides = [1, 1]} : vector<8x128xf32> to vector<8x32xf32>
    %116 = vector.extract_strided_slice %114 {offsets = [0, 32], sizes = [8, 32], strides = [1, 1]} : vector<8x128xf32> to vector<8x32xf32>
    %117 = vector.extract_strided_slice %114 {offsets = [0, 64], sizes = [8, 32], strides = [1, 1]} : vector<8x128xf32> to vector<8x32xf32>
    %cst_29 = arith.constant 2.000000e+00 : f32
    %118 = vector.broadcast %cst_29 : f32 to vector<8x32xf32>
    %119 = arith.mulf %118, %117 : vector<8x32xf32>
    %cst_30 = arith.constant 1.000000e+00 : f32
    %120 = vector.broadcast %cst_30 : f32 to vector<8x32xf32>
    %121 = arith.subf %119, %120 : vector<8x32xf32>
    %122 = vector.extract_strided_slice %114 {offsets = [0, 96], sizes = [8, 32], strides = [1, 1]} : vector<8x128xf32> to vector<8x32xf32>
    %123 = arith.mulf %116, %102 : vector<8x32xf32>
    %124 = arith.mulf %115, %121 : vector<8x32xf32>
    %125 = arith.addf %123, %124 : vector<8x32xf32>
    %126 = math.tanh %125 : vector<8x32xf32>
    %127 = arith.mulf %122, %126 : vector<8x32xf32>
    %128 = vector.extract_strided_slice %8 {offsets = [40, 0], sizes = [8, 128], strides = [1, 1]} : vector<64x128xf32> to vector<8x128xf32>
    %129 = arith.addf %128, %6 : vector<8x128xf32>
    %130 = arith.truncf %127 : vector<8x32xf32> to vector<8x32xbf16>
    %cst_31 = arith.constant dense<0.000000e+00> : vector<8x128xf32>
    %131 = tpu.matmul %130, %10, %cst_31 {dimension_numbers = #tpu.dot_dimension_numbers<[1], [0], [0], [1], [0, 0, 1, 1], [], []>} : vector<8x32xbf16>, vector<32x128xbf16>, vector<8x128xf32> -> vector<8x128xf32>
    %132 = arith.addf %129, %131 : vector<8x128xf32>
    %133 = arith.negf %132 : vector<8x128xf32>
    %134 = math.exp %133 : vector<8x128xf32>
    %cst_32 = arith.constant 1.000000e+00 : f32
    %135 = vector.broadcast %cst_32 : f32 to vector<8x128xf32>
    %136 = arith.addf %135, %134 : vector<8x128xf32>
    %137 = arith.divf %135, %136 : vector<8x128xf32>
    %138 = vector.extract_strided_slice %137 {offsets = [0, 0], sizes = [8, 32], strides = [1, 1]} : vector<8x128xf32> to vector<8x32xf32>
    %139 = vector.extract_strided_slice %137 {offsets = [0, 32], sizes = [8, 32], strides = [1, 1]} : vector<8x128xf32> to vector<8x32xf32>
    %140 = vector.extract_strided_slice %137 {offsets = [0, 64], sizes = [8, 32], strides = [1, 1]} : vector<8x128xf32> to vector<8x32xf32>
    %cst_33 = arith.constant 2.000000e+00 : f32
    %141 = vector.broadcast %cst_33 : f32 to vector<8x32xf32>
    %142 = arith.mulf %141, %140 : vector<8x32xf32>
    %cst_34 = arith.constant 1.000000e+00 : f32
    %143 = vector.broadcast %cst_34 : f32 to vector<8x32xf32>
    %144 = arith.subf %142, %143 : vector<8x32xf32>
    %145 = vector.extract_strided_slice %137 {offsets = [0, 96], sizes = [8, 32], strides = [1, 1]} : vector<8x128xf32> to vector<8x32xf32>
    %146 = arith.mulf %139, %125 : vector<8x32xf32>
    %147 = arith.mulf %138, %144 : vector<8x32xf32>
    %148 = arith.addf %146, %147 : vector<8x32xf32>
    %149 = math.tanh %148 : vector<8x32xf32>
    %150 = arith.mulf %145, %149 : vector<8x32xf32>
    %151 = vector.extract_strided_slice %8 {offsets = [48, 0], sizes = [8, 128], strides = [1, 1]} : vector<64x128xf32> to vector<8x128xf32>
    %152 = arith.addf %151, %6 : vector<8x128xf32>
    %153 = arith.truncf %150 : vector<8x32xf32> to vector<8x32xbf16>
    %cst_35 = arith.constant dense<0.000000e+00> : vector<8x128xf32>
    %154 = tpu.matmul %153, %10, %cst_35 {dimension_numbers = #tpu.dot_dimension_numbers<[1], [0], [0], [1], [0, 0, 1, 1], [], []>} : vector<8x32xbf16>, vector<32x128xbf16>, vector<8x128xf32> -> vector<8x128xf32>
    %155 = arith.addf %152, %154 : vector<8x128xf32>
    %156 = arith.negf %155 : vector<8x128xf32>
    %157 = math.exp %156 : vector<8x128xf32>
    %cst_36 = arith.constant 1.000000e+00 : f32
    %158 = vector.broadcast %cst_36 : f32 to vector<8x128xf32>
    %159 = arith.addf %158, %157 : vector<8x128xf32>
    %160 = arith.divf %158, %159 : vector<8x128xf32>
    %161 = vector.extract_strided_slice %160 {offsets = [0, 0], sizes = [8, 32], strides = [1, 1]} : vector<8x128xf32> to vector<8x32xf32>
    %162 = vector.extract_strided_slice %160 {offsets = [0, 32], sizes = [8, 32], strides = [1, 1]} : vector<8x128xf32> to vector<8x32xf32>
    %163 = vector.extract_strided_slice %160 {offsets = [0, 64], sizes = [8, 32], strides = [1, 1]} : vector<8x128xf32> to vector<8x32xf32>
    %cst_37 = arith.constant 2.000000e+00 : f32
    %164 = vector.broadcast %cst_37 : f32 to vector<8x32xf32>
    %165 = arith.mulf %164, %163 : vector<8x32xf32>
    %cst_38 = arith.constant 1.000000e+00 : f32
    %166 = vector.broadcast %cst_38 : f32 to vector<8x32xf32>
    %167 = arith.subf %165, %166 : vector<8x32xf32>
    %168 = vector.extract_strided_slice %160 {offsets = [0, 96], sizes = [8, 32], strides = [1, 1]} : vector<8x128xf32> to vector<8x32xf32>
    %169 = arith.mulf %162, %148 : vector<8x32xf32>
    %170 = arith.mulf %161, %167 : vector<8x32xf32>
    %171 = arith.addf %169, %170 : vector<8x32xf32>
    %172 = math.tanh %171 : vector<8x32xf32>
    %173 = arith.mulf %168, %172 : vector<8x32xf32>
    %174 = vector.extract_strided_slice %8 {offsets = [56, 0], sizes = [8, 128], strides = [1, 1]} : vector<64x128xf32> to vector<8x128xf32>
    %175 = arith.addf %174, %6 : vector<8x128xf32>
    %176 = arith.truncf %173 : vector<8x32xf32> to vector<8x32xbf16>
    %cst_39 = arith.constant dense<0.000000e+00> : vector<8x128xf32>
    %177 = tpu.matmul %176, %10, %cst_39 {dimension_numbers = #tpu.dot_dimension_numbers<[1], [0], [0], [1], [0, 0, 1, 1], [], []>} : vector<8x32xbf16>, vector<32x128xbf16>, vector<8x128xf32> -> vector<8x128xf32>
    %178 = arith.addf %175, %177 : vector<8x128xf32>
    %179 = arith.negf %178 : vector<8x128xf32>
    %180 = math.exp %179 : vector<8x128xf32>
    %cst_40 = arith.constant 1.000000e+00 : f32
    %181 = vector.broadcast %cst_40 : f32 to vector<8x128xf32>
    %182 = arith.addf %181, %180 : vector<8x128xf32>
    %183 = arith.divf %181, %182 : vector<8x128xf32>
    %184 = vector.extract_strided_slice %183 {offsets = [0, 0], sizes = [8, 32], strides = [1, 1]} : vector<8x128xf32> to vector<8x32xf32>
    %185 = vector.extract_strided_slice %183 {offsets = [0, 32], sizes = [8, 32], strides = [1, 1]} : vector<8x128xf32> to vector<8x32xf32>
    %186 = vector.extract_strided_slice %183 {offsets = [0, 64], sizes = [8, 32], strides = [1, 1]} : vector<8x128xf32> to vector<8x32xf32>
    %cst_41 = arith.constant 2.000000e+00 : f32
    %187 = vector.broadcast %cst_41 : f32 to vector<8x32xf32>
    %188 = arith.mulf %187, %186 : vector<8x32xf32>
    %cst_42 = arith.constant 1.000000e+00 : f32
    %189 = vector.broadcast %cst_42 : f32 to vector<8x32xf32>
    %190 = arith.subf %188, %189 : vector<8x32xf32>
    %191 = vector.extract_strided_slice %183 {offsets = [0, 96], sizes = [8, 32], strides = [1, 1]} : vector<8x128xf32> to vector<8x32xf32>
    %192 = arith.mulf %185, %171 : vector<8x32xf32>
    %193 = arith.mulf %184, %190 : vector<8x32xf32>
    %194 = arith.addf %192, %193 : vector<8x32xf32>
    %195 = math.tanh %194 : vector<8x32xf32>
    %196 = arith.mulf %191, %195 : vector<8x32xf32>
    %c56 = arith.constant 56 : index
    %c0_43 = arith.constant 0 : index
    %197 = vector.load %arg3[%c56, %c0_43] : memref<200x128xf32, #tpu.memory_space<vmem>>, vector<32x128xf32>
    %cst_44 = arith.constant dense<0.000000e+00> : vector<8x128xf32>
    %198 = tpu.matmul %196, %197, %cst_44 {dimension_numbers = #tpu.dot_dimension_numbers<[1], [0], [0], [1], [0, 0, 1, 1], [], []>} : vector<8x32xf32>, vector<32x128xf32>, vector<8x128xf32> -> vector<8x128xf32>
    %c88 = arith.constant 88 : index
    %c0_45 = arith.constant 0 : index
    %199 = vector.load %arg3[%c88, %c0_45] : memref<200x128xf32, #tpu.memory_space<vmem>>, vector<1x128xf32>
    %200 = vector.broadcast %199 : vector<1x128xf32> to vector<8x128xf32>
    %201 = arith.addf %198, %200 : vector<8x128xf32>
    %c0_46 = arith.constant 0 : index
    %c0_47 = arith.constant 0 : index
    %202 = vector.load %arg5[%c0_46, %c0_47] : memref<8x128xf32, #tpu.memory_space<vmem>>, vector<8x128xf32>
    tpu.vector_store %arg5[%c0_46, %c0_47], %201 {strides = array<i32>} : memref<8x128xf32, #tpu.memory_space<vmem>>, vector<8x128xf32>,
    %203 = vector.extract_strided_slice %201 {offsets = [0, 0], sizes = [8, 16], strides = [1, 1]} : vector<8x128xf32> to vector<8x16xf32>
    %204 = vector.extract_strided_slice %201 {offsets = [0, 16], sizes = [8, 16], strides = [1, 1]} : vector<8x128xf32> to vector<8x16xf32>
    %c0_48 = arith.constant 0 : index
    %c0_49 = arith.constant 0 : index
    %205 = vector.load %arg2[%c0_48, %c0_49] : memref<8x16xf32, #tpu.memory_space<vmem>>, vector<8x16xf32>
    %cst_50 = arith.constant 5.000000e-01 : f32
    %206 = vector.broadcast %cst_50 : f32 to vector<8x16xf32>
    %207 = arith.mulf %206, %204 : vector<8x16xf32>
    %208 = math.exp %207 : vector<8x16xf32>
    %209 = arith.mulf %205, %208 : vector<8x16xf32>
    %210 = arith.addf %203, %209 : vector<8x16xf32>
    %c96 = arith.constant 96 : index
    %c0_51 = arith.constant 0 : index
    %211 = vector.load %arg3[%c96, %c0_51] : memref<200x128xf32, #tpu.memory_space<vmem>>, vector<8x128xf32>
    %c104 = arith.constant 104 : index
    %c0_52 = arith.constant 0 : index
    %212 = vector.load %arg3[%c104, %c0_52] : memref<200x128xf32, #tpu.memory_space<vmem>>, vector<16x128xf32>
    %cst_53 = arith.constant dense<0.000000e+00> : vector<8x128xf32>
    %213 = tpu.matmul %0, %211, %cst_53 {dimension_numbers = #tpu.dot_dimension_numbers<[1], [0], [0], [1], [0, 0, 1, 1], [], []>} : vector<8x8xf32>, vector<8x128xf32>, vector<8x128xf32> -> vector<8x128xf32>
    %cst_54 = arith.constant dense<0.000000e+00> : vector<8x128xf32>
    %214 = tpu.matmul %210, %212, %cst_54 {dimension_numbers = #tpu.dot_dimension_numbers<[1], [0], [0], [1], [0, 0, 1, 1], [], []>} : vector<8x16xf32>, vector<16x128xf32>, vector<8x128xf32> -> vector<8x128xf32>
    %215 = arith.addf %213, %214 : vector<8x128xf32>
    %c152 = arith.constant 152 : index
    %c0_55 = arith.constant 0 : index
    %216 = vector.load %arg3[%c152, %c0_55] : memref<200x128xf32, #tpu.memory_space<vmem>>, vector<1x128xf32>
    %217 = vector.broadcast %216 : vector<1x128xf32> to vector<8x128xf32>
    %218 = arith.addf %215, %217 : vector<8x128xf32>
    %c120 = arith.constant 120 : index
    %c0_56 = arith.constant 0 : index
    %219 = vector.load %arg3[%c120, %c0_56] : memref<200x128xf32, #tpu.memory_space<vmem>>, vector<32x128xf32>
    %220 = arith.truncf %219 : vector<32x128xf32> to vector<32x128xbf16>
    %cst_57 = arith.constant 0.000000e+00 : f32
    %221 = vector.broadcast %cst_57 : f32 to vector<8x32xf32>
    %cst_58 = arith.constant 0.000000e+00 : f32
    %222 = vector.broadcast %cst_58 : f32 to vector<8x32xf32>
    %223 = arith.truncf %221 : vector<8x32xf32> to vector<8x32xbf16>
    %cst_59 = arith.constant dense<0.000000e+00> : vector<8x128xf32>
    %224 = tpu.matmul %223, %220, %cst_59 {dimension_numbers = #tpu.dot_dimension_numbers<[1], [0], [0], [1], [0, 0, 1, 1], [], []>} : vector<8x32xbf16>, vector<32x128xbf16>, vector<8x128xf32> -> vector<8x128xf32>
    %225 = arith.addf %218, %224 : vector<8x128xf32>
    %226 = arith.negf %225 : vector<8x128xf32>
    %227 = math.exp %226 : vector<8x128xf32>
    %cst_60 = arith.constant 1.000000e+00 : f32
    %228 = vector.broadcast %cst_60 : f32 to vector<8x128xf32>
    %229 = arith.addf %228, %227 : vector<8x128xf32>
    %230 = arith.divf %228, %229 : vector<8x128xf32>
    %231 = vector.extract_strided_slice %230 {offsets = [0, 0], sizes = [8, 32], strides = [1, 1]} : vector<8x128xf32> to vector<8x32xf32>
    %232 = vector.extract_strided_slice %230 {offsets = [0, 32], sizes = [8, 32], strides = [1, 1]} : vector<8x128xf32> to vector<8x32xf32>
    %233 = vector.extract_strided_slice %230 {offsets = [0, 64], sizes = [8, 32], strides = [1, 1]} : vector<8x128xf32> to vector<8x32xf32>
    %cst_61 = arith.constant 2.000000e+00 : f32
    %234 = vector.broadcast %cst_61 : f32 to vector<8x32xf32>
    %235 = arith.mulf %234, %233 : vector<8x32xf32>
    %cst_62 = arith.constant 1.000000e+00 : f32
    %236 = vector.broadcast %cst_62 : f32 to vector<8x32xf32>
    %237 = arith.subf %235, %236 : vector<8x32xf32>
    %238 = vector.extract_strided_slice %230 {offsets = [0, 96], sizes = [8, 32], strides = [1, 1]} : vector<8x128xf32> to vector<8x32xf32>
    %239 = arith.mulf %232, %222 : vector<8x32xf32>
    %240 = arith.mulf %231, %237 : vector<8x32xf32>
    %241 = arith.addf %239, %240 : vector<8x32xf32>
    %242 = math.tanh %241 : vector<8x32xf32>
    %243 = arith.mulf %238, %242 : vector<8x32xf32>
    %c0_63 = arith.constant 0 : index
    %c0_64 = arith.constant 0 : index
    %244 = vector.load %arg6[%c0_63, %c0_64] : memref<64x32xf32, #tpu.memory_space<vmem>>, vector<8x32xf32>
    tpu.vector_store %arg6[%c0_63, %c0_64], %243 {strides = array<i32>} : memref<64x32xf32, #tpu.memory_space<vmem>>, vector<8x32xf32>,
    %245 = arith.truncf %243 : vector<8x32xf32> to vector<8x32xbf16>
    %cst_65 = arith.constant dense<0.000000e+00> : vector<8x128xf32>
    %246 = tpu.matmul %245, %220, %cst_65 {dimension_numbers = #tpu.dot_dimension_numbers<[1], [0], [0], [1], [0, 0, 1, 1], [], []>} : vector<8x32xbf16>, vector<32x128xbf16>, vector<8x128xf32> -> vector<8x128xf32>
    %247 = arith.addf %218, %246 : vector<8x128xf32>
    %248 = arith.negf %247 : vector<8x128xf32>
    %249 = math.exp %248 : vector<8x128xf32>
    %cst_66 = arith.constant 1.000000e+00 : f32
    %250 = vector.broadcast %cst_66 : f32 to vector<8x128xf32>
    %251 = arith.addf %250, %249 : vector<8x128xf32>
    %252 = arith.divf %250, %251 : vector<8x128xf32>
    %253 = vector.extract_strided_slice %252 {offsets = [0, 0], sizes = [8, 32], strides = [1, 1]} : vector<8x128xf32> to vector<8x32xf32>
    %254 = vector.extract_strided_slice %252 {offsets = [0, 32], sizes = [8, 32], strides = [1, 1]} : vector<8x128xf32> to vector<8x32xf32>
    %255 = vector.extract_strided_slice %252 {offsets = [0, 64], sizes = [8, 32], strides = [1, 1]} : vector<8x128xf32> to vector<8x32xf32>
    %cst_67 = arith.constant 2.000000e+00 : f32
    %256 = vector.broadcast %cst_67 : f32 to vector<8x32xf32>
    %257 = arith.mulf %256, %255 : vector<8x32xf32>
    %cst_68 = arith.constant 1.000000e+00 : f32
    %258 = vector.broadcast %cst_68 : f32 to vector<8x32xf32>
    %259 = arith.subf %257, %258 : vector<8x32xf32>
    %260 = vector.extract_strided_slice %252 {offsets = [0, 96], sizes = [8, 32], strides = [1, 1]} : vector<8x128xf32> to vector<8x32xf32>
    %261 = arith.mulf %254, %241 : vector<8x32xf32>
    %262 = arith.mulf %253, %259 : vector<8x32xf32>
    %263 = arith.addf %261, %262 : vector<8x32xf32>
    %264 = math.tanh %263 : vector<8x32xf32>
    %265 = arith.mulf %260, %264 : vector<8x32xf32>
    %c8_69 = arith.constant 8 : index
    %c0_70 = arith.constant 0 : index
    %266 = vector.load %arg6[%c8_69, %c0_70] : memref<64x32xf32, #tpu.memory_space<vmem>>, vector<8x32xf32>
    tpu.vector_store %arg6[%c8_69, %c0_70], %265 {strides = array<i32>} : memref<64x32xf32, #tpu.memory_space<vmem>>, vector<8x32xf32>,
    %267 = arith.truncf %265 : vector<8x32xf32> to vector<8x32xbf16>
    %cst_71 = arith.constant dense<0.000000e+00> : vector<8x128xf32>
    %268 = tpu.matmul %267, %220, %cst_71 {dimension_numbers = #tpu.dot_dimension_numbers<[1], [0], [0], [1], [0, 0, 1, 1], [], []>} : vector<8x32xbf16>, vector<32x128xbf16>, vector<8x128xf32> -> vector<8x128xf32>
    %269 = arith.addf %218, %268 : vector<8x128xf32>
    %270 = arith.negf %269 : vector<8x128xf32>
    %271 = math.exp %270 : vector<8x128xf32>
    %cst_72 = arith.constant 1.000000e+00 : f32
    %272 = vector.broadcast %cst_72 : f32 to vector<8x128xf32>
    %273 = arith.addf %272, %271 : vector<8x128xf32>
    %274 = arith.divf %272, %273 : vector<8x128xf32>
    %275 = vector.extract_strided_slice %274 {offsets = [0, 0], sizes = [8, 32], strides = [1, 1]} : vector<8x128xf32> to vector<8x32xf32>
    %276 = vector.extract_strided_slice %274 {offsets = [0, 32], sizes = [8, 32], strides = [1, 1]} : vector<8x128xf32> to vector<8x32xf32>
    %277 = vector.extract_strided_slice %274 {offsets = [0, 64], sizes = [8, 32], strides = [1, 1]} : vector<8x128xf32> to vector<8x32xf32>
    %cst_73 = arith.constant 2.000000e+00 : f32
    %278 = vector.broadcast %cst_73 : f32 to vector<8x32xf32>
    %279 = arith.mulf %278, %277 : vector<8x32xf32>
    %cst_74 = arith.constant 1.000000e+00 : f32
    %280 = vector.broadcast %cst_74 : f32 to vector<8x32xf32>
    %281 = arith.subf %279, %280 : vector<8x32xf32>
    %282 = vector.extract_strided_slice %274 {offsets = [0, 96], sizes = [8, 32], strides = [1, 1]} : vector<8x128xf32> to vector<8x32xf32>
    %283 = arith.mulf %276, %263 : vector<8x32xf32>
    %284 = arith.mulf %275, %281 : vector<8x32xf32>
    %285 = arith.addf %283, %284 : vector<8x32xf32>
    %286 = math.tanh %285 : vector<8x32xf32>
    %287 = arith.mulf %282, %286 : vector<8x32xf32>
    %c16_75 = arith.constant 16 : index
    %c0_76 = arith.constant 0 : index
    %288 = vector.load %arg6[%c16_75, %c0_76] : memref<64x32xf32, #tpu.memory_space<vmem>>, vector<8x32xf32>
    tpu.vector_store %arg6[%c16_75, %c0_76], %287 {strides = array<i32>} : memref<64x32xf32, #tpu.memory_space<vmem>>, vector<8x32xf32>,
    %289 = arith.truncf %287 : vector<8x32xf32> to vector<8x32xbf16>
    %cst_77 = arith.constant dense<0.000000e+00> : vector<8x128xf32>
    %290 = tpu.matmul %289, %220, %cst_77 {dimension_numbers = #tpu.dot_dimension_numbers<[1], [0], [0], [1], [0, 0, 1, 1], [], []>} : vector<8x32xbf16>, vector<32x128xbf16>, vector<8x128xf32> -> vector<8x128xf32>
    %291 = arith.addf %218, %290 : vector<8x128xf32>
    %292 = arith.negf %291 : vector<8x128xf32>
    %293 = math.exp %292 : vector<8x128xf32>
    %cst_78 = arith.constant 1.000000e+00 : f32
    %294 = vector.broadcast %cst_78 : f32 to vector<8x128xf32>
    %295 = arith.addf %294, %293 : vector<8x128xf32>
    %296 = arith.divf %294, %295 : vector<8x128xf32>
    %297 = vector.extract_strided_slice %296 {offsets = [0, 0], sizes = [8, 32], strides = [1, 1]} : vector<8x128xf32> to vector<8x32xf32>
    %298 = vector.extract_strided_slice %296 {offsets = [0, 32], sizes = [8, 32], strides = [1, 1]} : vector<8x128xf32> to vector<8x32xf32>
    %299 = vector.extract_strided_slice %296 {offsets = [0, 64], sizes = [8, 32], strides = [1, 1]} : vector<8x128xf32> to vector<8x32xf32>
    %cst_79 = arith.constant 2.000000e+00 : f32
    %300 = vector.broadcast %cst_79 : f32 to vector<8x32xf32>
    %301 = arith.mulf %300, %299 : vector<8x32xf32>
    %cst_80 = arith.constant 1.000000e+00 : f32
    %302 = vector.broadcast %cst_80 : f32 to vector<8x32xf32>
    %303 = arith.subf %301, %302 : vector<8x32xf32>
    %304 = vector.extract_strided_slice %296 {offsets = [0, 96], sizes = [8, 32], strides = [1, 1]} : vector<8x128xf32> to vector<8x32xf32>
    %305 = arith.mulf %298, %285 : vector<8x32xf32>
    %306 = arith.mulf %297, %303 : vector<8x32xf32>
    %307 = arith.addf %305, %306 : vector<8x32xf32>
    %308 = math.tanh %307 : vector<8x32xf32>
    %309 = arith.mulf %304, %308 : vector<8x32xf32>
    %c24 = arith.constant 24 : index
    %c0_81 = arith.constant 0 : index
    %310 = vector.load %arg6[%c24, %c0_81] : memref<64x32xf32, #tpu.memory_space<vmem>>, vector<8x32xf32>
    tpu.vector_store %arg6[%c24, %c0_81], %309 {strides = array<i32>} : memref<64x32xf32, #tpu.memory_space<vmem>>, vector<8x32xf32>,
    %311 = arith.truncf %309 : vector<8x32xf32> to vector<8x32xbf16>
    %cst_82 = arith.constant dense<0.000000e+00> : vector<8x128xf32>
    %312 = tpu.matmul %311, %220, %cst_82 {dimension_numbers = #tpu.dot_dimension_numbers<[1], [0], [0], [1], [0, 0, 1, 1], [], []>} : vector<8x32xbf16>, vector<32x128xbf16>, vector<8x128xf32> -> vector<8x128xf32>
    %313 = arith.addf %218, %312 : vector<8x128xf32>
    %314 = arith.negf %313 : vector<8x128xf32>
    %315 = math.exp %314 : vector<8x128xf32>
    %cst_83 = arith.constant 1.000000e+00 : f32
    %316 = vector.broadcast %cst_83 : f32 to vector<8x128xf32>
    %317 = arith.addf %316, %315 : vector<8x128xf32>
    %318 = arith.divf %316, %317 : vector<8x128xf32>
    %319 = vector.extract_strided_slice %318 {offsets = [0, 0], sizes = [8, 32], strides = [1, 1]} : vector<8x128xf32> to vector<8x32xf32>
    %320 = vector.extract_strided_slice %318 {offsets = [0, 32], sizes = [8, 32], strides = [1, 1]} : vector<8x128xf32> to vector<8x32xf32>
    %321 = vector.extract_strided_slice %318 {offsets = [0, 64], sizes = [8, 32], strides = [1, 1]} : vector<8x128xf32> to vector<8x32xf32>
    %cst_84 = arith.constant 2.000000e+00 : f32
    %322 = vector.broadcast %cst_84 : f32 to vector<8x32xf32>
    %323 = arith.mulf %322, %321 : vector<8x32xf32>
    %cst_85 = arith.constant 1.000000e+00 : f32
    %324 = vector.broadcast %cst_85 : f32 to vector<8x32xf32>
    %325 = arith.subf %323, %324 : vector<8x32xf32>
    %326 = vector.extract_strided_slice %318 {offsets = [0, 96], sizes = [8, 32], strides = [1, 1]} : vector<8x128xf32> to vector<8x32xf32>
    %327 = arith.mulf %320, %307 : vector<8x32xf32>
    %328 = arith.mulf %319, %325 : vector<8x32xf32>
    %329 = arith.addf %327, %328 : vector<8x32xf32>
    %330 = math.tanh %329 : vector<8x32xf32>
    %331 = arith.mulf %326, %330 : vector<8x32xf32>
    %c32 = arith.constant 32 : index
    %c0_86 = arith.constant 0 : index
    %332 = vector.load %arg6[%c32, %c0_86] : memref<64x32xf32, #tpu.memory_space<vmem>>, vector<8x32xf32>
    tpu.vector_store %arg6[%c32, %c0_86], %331 {strides = array<i32>} : memref<64x32xf32, #tpu.memory_space<vmem>>, vector<8x32xf32>,
    %333 = arith.truncf %331 : vector<8x32xf32> to vector<8x32xbf16>
    %cst_87 = arith.constant dense<0.000000e+00> : vector<8x128xf32>
    %334 = tpu.matmul %333, %220, %cst_87 {dimension_numbers = #tpu.dot_dimension_numbers<[1], [0], [0], [1], [0, 0, 1, 1], [], []>} : vector<8x32xbf16>, vector<32x128xbf16>, vector<8x128xf32> -> vector<8x128xf32>
    %335 = arith.addf %218, %334 : vector<8x128xf32>
    %336 = arith.negf %335 : vector<8x128xf32>
    %337 = math.exp %336 : vector<8x128xf32>
    %cst_88 = arith.constant 1.000000e+00 : f32
    %338 = vector.broadcast %cst_88 : f32 to vector<8x128xf32>
    %339 = arith.addf %338, %337 : vector<8x128xf32>
    %340 = arith.divf %338, %339 : vector<8x128xf32>
    %341 = vector.extract_strided_slice %340 {offsets = [0, 0], sizes = [8, 32], strides = [1, 1]} : vector<8x128xf32> to vector<8x32xf32>
    %342 = vector.extract_strided_slice %340 {offsets = [0, 32], sizes = [8, 32], strides = [1, 1]} : vector<8x128xf32> to vector<8x32xf32>
    %343 = vector.extract_strided_slice %340 {offsets = [0, 64], sizes = [8, 32], strides = [1, 1]} : vector<8x128xf32> to vector<8x32xf32>
    %cst_89 = arith.constant 2.000000e+00 : f32
    %344 = vector.broadcast %cst_89 : f32 to vector<8x32xf32>
    %345 = arith.mulf %344, %343 : vector<8x32xf32>
    %cst_90 = arith.constant 1.000000e+00 : f32
    %346 = vector.broadcast %cst_90 : f32 to vector<8x32xf32>
    %347 = arith.subf %345, %346 : vector<8x32xf32>
    %348 = vector.extract_strided_slice %340 {offsets = [0, 96], sizes = [8, 32], strides = [1, 1]} : vector<8x128xf32> to vector<8x32xf32>
    %349 = arith.mulf %342, %329 : vector<8x32xf32>
    %350 = arith.mulf %341, %347 : vector<8x32xf32>
    %351 = arith.addf %349, %350 : vector<8x32xf32>
    %352 = math.tanh %351 : vector<8x32xf32>
    %353 = arith.mulf %348, %352 : vector<8x32xf32>
    %c40 = arith.constant 40 : index
    %c0_91 = arith.constant 0 : index
    %354 = vector.load %arg6[%c40, %c0_91] : memref<64x32xf32, #tpu.memory_space<vmem>>, vector<8x32xf32>
    tpu.vector_store %arg6[%c40, %c0_91], %353 {strides = array<i32>} : memref<64x32xf32, #tpu.memory_space<vmem>>, vector<8x32xf32>,
    %355 = arith.truncf %353 : vector<8x32xf32> to vector<8x32xbf16>
    %cst_92 = arith.constant dense<0.000000e+00> : vector<8x128xf32>
    %356 = tpu.matmul %355, %220, %cst_92 {dimension_numbers = #tpu.dot_dimension_numbers<[1], [0], [0], [1], [0, 0, 1, 1], [], []>} : vector<8x32xbf16>, vector<32x128xbf16>, vector<8x128xf32> -> vector<8x128xf32>
    %357 = arith.addf %218, %356 : vector<8x128xf32>
    %358 = arith.negf %357 : vector<8x128xf32>
    %359 = math.exp %358 : vector<8x128xf32>
    %cst_93 = arith.constant 1.000000e+00 : f32
    %360 = vector.broadcast %cst_93 : f32 to vector<8x128xf32>
    %361 = arith.addf %360, %359 : vector<8x128xf32>
    %362 = arith.divf %360, %361 : vector<8x128xf32>
    %363 = vector.extract_strided_slice %362 {offsets = [0, 0], sizes = [8, 32], strides = [1, 1]} : vector<8x128xf32> to vector<8x32xf32>
    %364 = vector.extract_strided_slice %362 {offsets = [0, 32], sizes = [8, 32], strides = [1, 1]} : vector<8x128xf32> to vector<8x32xf32>
    %365 = vector.extract_strided_slice %362 {offsets = [0, 64], sizes = [8, 32], strides = [1, 1]} : vector<8x128xf32> to vector<8x32xf32>
    %cst_94 = arith.constant 2.000000e+00 : f32
    %366 = vector.broadcast %cst_94 : f32 to vector<8x32xf32>
    %367 = arith.mulf %366, %365 : vector<8x32xf32>
    %cst_95 = arith.constant 1.000000e+00 : f32
    %368 = vector.broadcast %cst_95 : f32 to vector<8x32xf32>
    %369 = arith.subf %367, %368 : vector<8x32xf32>
    %370 = vector.extract_strided_slice %362 {offsets = [0, 96], sizes = [8, 32], strides = [1, 1]} : vector<8x128xf32> to vector<8x32xf32>
    %371 = arith.mulf %364, %351 : vector<8x32xf32>
    %372 = arith.mulf %363, %369 : vector<8x32xf32>
    %373 = arith.addf %371, %372 : vector<8x32xf32>
    %374 = math.tanh %373 : vector<8x32xf32>
    %375 = arith.mulf %370, %374 : vector<8x32xf32>
    %c48_96 = arith.constant 48 : index
    %c0_97 = arith.constant 0 : index
    %376 = vector.load %arg6[%c48_96, %c0_97] : memref<64x32xf32, #tpu.memory_space<vmem>>, vector<8x32xf32>
    tpu.vector_store %arg6[%c48_96, %c0_97], %375 {strides = array<i32>} : memref<64x32xf32, #tpu.memory_space<vmem>>, vector<8x32xf32>,
    %377 = arith.truncf %375 : vector<8x32xf32> to vector<8x32xbf16>
    %cst_98 = arith.constant dense<0.000000e+00> : vector<8x128xf32>
    %378 = tpu.matmul %377, %220, %cst_98 {dimension_numbers = #tpu.dot_dimension_numbers<[1], [0], [0], [1], [0, 0, 1, 1], [], []>} : vector<8x32xbf16>, vector<32x128xbf16>, vector<8x128xf32> -> vector<8x128xf32>
    %379 = arith.addf %218, %378 : vector<8x128xf32>
    %380 = arith.negf %379 : vector<8x128xf32>
    %381 = math.exp %380 : vector<8x128xf32>
    %cst_99 = arith.constant 1.000000e+00 : f32
    %382 = vector.broadcast %cst_99 : f32 to vector<8x128xf32>
    %383 = arith.addf %382, %381 : vector<8x128xf32>
    %384 = arith.divf %382, %383 : vector<8x128xf32>
    %385 = vector.extract_strided_slice %384 {offsets = [0, 0], sizes = [8, 32], strides = [1, 1]} : vector<8x128xf32> to vector<8x32xf32>
    %386 = vector.extract_strided_slice %384 {offsets = [0, 32], sizes = [8, 32], strides = [1, 1]} : vector<8x128xf32> to vector<8x32xf32>
    %387 = vector.extract_strided_slice %384 {offsets = [0, 64], sizes = [8, 32], strides = [1, 1]} : vector<8x128xf32> to vector<8x32xf32>
    %cst_100 = arith.constant 2.000000e+00 : f32
    %388 = vector.broadcast %cst_100 : f32 to vector<8x32xf32>
    %389 = arith.mulf %388, %387 : vector<8x32xf32>
    %cst_101 = arith.constant 1.000000e+00 : f32
    %390 = vector.broadcast %cst_101 : f32 to vector<8x32xf32>
    %391 = arith.subf %389, %390 : vector<8x32xf32>
    %392 = vector.extract_strided_slice %384 {offsets = [0, 96], sizes = [8, 32], strides = [1, 1]} : vector<8x128xf32> to vector<8x32xf32>
    %393 = arith.mulf %386, %373 : vector<8x32xf32>
    %394 = arith.mulf %385, %391 : vector<8x32xf32>
    %395 = arith.addf %393, %394 : vector<8x32xf32>
    %396 = math.tanh %395 : vector<8x32xf32>
    %397 = arith.mulf %392, %396 : vector<8x32xf32>
    %c56_102 = arith.constant 56 : index
    %c0_103 = arith.constant 0 : index
    %398 = vector.load %arg6[%c56_102, %c0_103] : memref<64x32xf32, #tpu.memory_space<vmem>>, vector<8x32xf32>
    tpu.vector_store %arg6[%c56_102, %c0_103], %397 {strides = array<i32>} : memref<64x32xf32, #tpu.memory_space<vmem>>, vector<8x32xf32>,
    %c0_104 = arith.constant 0 : index
    %c0_105 = arith.constant 0 : index
    %399 = vector.load %arg6[%c0_104, %c0_105] : memref<64x32xf32, #tpu.memory_space<vmem>>, vector<64x32xf32>
    %c160 = arith.constant 160 : index
    %c0_106 = arith.constant 0 : index
    %400 = vector.load %arg3[%c160, %c0_106] : memref<200x128xf32, #tpu.memory_space<vmem>>, vector<32x128xf32>
    %cst_107 = arith.constant dense<0.000000e+00> : vector<64x128xf32>
    %401 = tpu.matmul %399, %400, %cst_107 {dimension_numbers = #tpu.dot_dimension_numbers<[1], [0], [0], [1], [0, 0, 1, 1], [], []>} : vector<64x32xf32>, vector<32x128xf32>, vector<64x128xf32> -> vector<64x128xf32>
    %c192 = arith.constant 192 : index
    %c0_108 = arith.constant 0 : index
    %402 = vector.load %arg3[%c192, %c0_108] : memref<200x128xf32, #tpu.memory_space<vmem>>, vector<1x128xf32>
    %403 = vector.broadcast %402 : vector<1x128xf32> to vector<64x128xf32>
    %404 = arith.addf %401, %403 : vector<64x128xf32>
    %c0_109 = arith.constant 0 : index
    %c0_110 = arith.constant 0 : index
    %405 = vector.load %arg4[%c0_109, %c0_110] : memref<64x128xf32, #tpu.memory_space<vmem>>, vector<64x128xf32>
    tpu.vector_store %arg4[%c0_109, %c0_110], %404 {strides = array<i32>} : memref<64x128xf32, #tpu.memory_space<vmem>>, vector<64x128xf32>,
    return
  }
}

</mosaic_0001>

<llo_original>
// kernel: handwriting_forward.1
$region0: #{handwriting_forward.1}
  #allocation0 [shape = 'u32[]', space=smem, size = 0x4, offset = 0x4, fixed_abs, tag = 'smem constant byte address 0x4 - core index']
  #allocation1 [shape = 'u32[144,128]{1,0:T(1,128)}', space=vmem, size = 0x12000, scoped, tag = 'internal scratch']
  #allocation2 [shape = 'f32[64,32]{1,0:T(8,128)}', space=vmem, size = 0x8000, scoped, tag = 'scratch operand']
  %s0 = inlined_call_operand.vmem [shape: f32[64,4], index: 0, kind: input, shape index: {}]
  %s1 = inlined_call_operand.vmem [shape: f32[8,8], index: 1, kind: input, shape index: {}]
  %s2 = inlined_call_operand.vmem [shape: f32[8,16], index: 2, kind: input, shape index: {}]
  %s3 = inlined_call_operand.vmem [shape: f32[200,128], index: 3, kind: input, shape index: {}]
  %s4 = inlined_call_operand.vmem [shape: f32[64,128], index: 4, kind: output, shape index: {0}]
  %s5 = inlined_call_operand.vmem [shape: f32[8,128], index: 5, kind: output, shape index: {1}]
  %6 = xla_tuple %s4, %s5
  %s7 = sld [smem:[#allocation0]]
  $region34: #{handwriting_forward.1} parent=0
    _
  %s9 = ssub.s32 1, %s7
  %s10 = scalar_select 0, %s9, %s7
  // Predicated region
  $region2: #{handwriting_forward.1} parent=0 // pred_check
    _
  $region3: #{handwriting_forward.1} parent=0 // pred_check_branch
    %12 = sbr.rel (0) target = $region5
  $region4: #{handwriting_forward.1} parent=0 // pred_region
    _
  $region5: #{handwriting_forward.1} parent=0 // pred_fallthru
    _
  // Predicated region
  $region6: #{handwriting_forward.1} parent=0 // pred_check
    _
  $region7: #{handwriting_forward.1} parent=0 // pred_check_branch
    %14 = sbr.rel (0) target = $region9
  $region8: #{handwriting_forward.1} parent=0 // pred_region
    _
  $region9: #{handwriting_forward.1} parent=0 // pred_fallthru
    _
  // Predicated region
  $region10: #{handwriting_forward.1} parent=0 // pred_check
    _
  $region11: #{handwriting_forward.1} parent=0 // pred_check_branch
    %16 = sbr.rel (0) target = $region13
  $region12: #{handwriting_forward.1} parent=0 // pred_region
    _
  $region13: #{handwriting_forward.1} parent=0 // pred_fallthru
    _
  // Predicated region
  $region14: #{handwriting_forward.1} parent=0 // pred_check
    _
  $region15: #{handwriting_forward.1} parent=0 // pred_check_branch
    %18 = sbr.rel (0) target = $region17
  $region16: #{handwriting_forward.1} parent=0 // pred_region
    _
  $region17: #{handwriting_forward.1} parent=0 // pred_fallthru
    _
  %v20 = vld [vmem:[%s1] sm:$0xff]
  %v21 = vld [vmem:[%s3] sm:$0xff]
  %v22 = vld [vmem:[%s3 + $0x8] sm:$0xf]
  %v23 = vld [vmem:[%s3 + $0x30] sm:$0x1]
  %v24 = vlaneseq
  %v25 = vshrl.u32 %v24, 7
  %v26 = vsub.s32 0, %v25
  %v27 = vrot.slane %v23, %v26
  %vm28 = vcmask 64512
  %v30 = vsel %vm28, %v20, 0
  %32 = vmatprep.subr.mxu0 0.0
  %33 = vmatpush1.msra.mxu0 %v21
  %34 = vmatprep.subr.mxu0 0.0
  %35 = vmatpush1.msra.mxu0 0.0
  %36 = vmatprep.subr.mxu0 0.0
  %37 = vmatpush1.msra.mxu0 0.0
  %38 = vmatprep.subr.mxu0 0.0
  %39 = vmatpush1.msra.mxu0 0.0
  %40 = vmatprep.subr.mxu0 0.0
  %41 = vmatpush1.msra.mxu0 0.0
  %42 = vmatprep.subr.mxu0 0.0
  %43 = vmatpush1.msra.mxu0 0.0
  %44 = vmatprep.subr.mxu0 0.0
  %45 = vmatpush1.msra.mxu0 0.0
  %46 = vmatprep.subr.mxu0 0.0
  %47 = vmatpush1.msra.mxu0 0.0
  %48 = vmatprep.subr.mxu0 0.0
  %49 = vmatpush1.msra.mxu0 0.0
  %50 = vmatprep.subr.mxu0 0.0
  %51 = vmatpush1.msra.mxu0 0.0
  %52 = vmatprep.subr.mxu0 0.0
  %53 = vmatpush1.msra.mxu0 0.0
  %54 = vmatprep.subr.mxu0 0.0
  %55 = vmatpush1.msra.mxu0 0.0
  %56 = vmatprep.subr.mxu0 0.0
  %57 = vmatpush1.msra.mxu0 0.0
  %58 = vmatprep.subr.mxu0 0.0
  %59 = vmatpush1.msra.mxu0 0.0
  %60 = vmatprep.subr.mxu0 0.0
  %61 = vmatpush1.msra.mxu0 0.0
  %62 = vmatprep.subr.mxu0 0.0
  %63 = vmatpush1.msra.mxu0 0.0
  %64 = vmatprep.subr.mxu0 0.0
  %65 = vmatpush1.msra.mxu0 0.0
  %66 = vmatprep.subr.mxu0 0.0
  %67 = vmatpush1.msra.mxu0 0.0
  %68 = vmatprep.subr.mxu0 0.0
  %69 = vmatpush1.msra.mxu0 0.0
  %70 = vmatprep.subr.mxu0 0.0
  %71 = vmatpush1.msra.mxu0 0.0
  %72 = vmatprep.subr.mxu0 0.0
  %73 = vmatpush1.msra.mxu0 0.0
  %74 = vmatprep.subr.mxu0 0.0
  %75 = vmatpush1.msra.mxu0 0.0
  %76 = vmatprep.subr.mxu0 0.0
  %77 = vmatpush1.msra.mxu0 0.0
  %78 = vmatprep.subr.mxu0 0.0
  %79 = vmatpush1.msra.mxu0 0.0
  %80 = vmatprep.subr.mxu0 0.0
  %81 = vmatpush1.msra.mxu0 0.0
  %82 = vmatprep.subr.mxu0 0.0
  %83 = vmatpush1.msra.mxu0 0.0
  %84 = vmatprep.subr.mxu0 0.0
  %85 = vmatpush1.msra.mxu0 0.0
  %86 = vmatprep.subr.mxu0 0.0
  %87 = vmatpush1.msra.mxu0 0.0
  %88 = vmatprep.subr.mxu0 0.0
  %89 = vmatpush1.msra.mxu0 0.0
  %90 = vmatprep.subr.mxu0 0.0
  %91 = vmatpush1.msra.mxu0 0.0
  %92 = vmatprep.subr.mxu0 0.0
  %93 = vmatpush1.msra.mxu0 0.0
  %94 = vmatprep.subr.mxu0 0.0
  %95 = vmatpush1.msra.mxu0 0.0
  %96 = vmatprep.mubr.f32.mxu0 0.0
  %97 = vmatmul.mubr.f32.gmra.mrb[0].mxu0 %v30
  %v98 = vpop.f32.mrb[0].mxu0
  %v99 = vadd.f32 %v27, %v98
  %v100 = vpop.f32.mrb[0].mxu0
  %101 = vdwg.mxu0
  %v102 = vld [vmem:[%s0] sm:$0xff]
  %v103 = vld [vmem:[%s0 + $0x8] sm:$0xff]
  %v104 = vld [vmem:[%s0 + $0x10] sm:$0xff]
  %v105 = vld [vmem:[%s0 + $0x18] sm:$0xff]
  %v106 = vld [vmem:[%s0 + $0x20] sm:$0xff]
  %v107 = vld [vmem:[%s0 + $0x28] sm:$0xff]
  %v108 = vld [vmem:[%s0 + $0x30] sm:$0xff]
  %v109 = vld [vmem:[%s0 + $0x38] sm:$0xff]
  %vm110 = vcmask 31744
  %v112 = vsel %vm110, %v102, 0
  %v115 = vsel %vm110, %v103, 0
  %v118 = vsel %vm110, %v104, 0
  %v121 = vsel %vm110, %v105, 0
  %v124 = vsel %vm110, %v106, 0
  %v127 = vsel %vm110, %v107, 0
  %v130 = vsel %vm110, %v108, 0
  %v133 = vsel %vm110, %v109, 0
  %vm135 = vcmask 1043456
  %v137 = vsel %vm135, %v22, 0
  %139 = vmatprep.subr.mxu0 0.0
  %140 = vmatpush1.msra.mxu0 %v137
  %141 = vmatprep.subr.mxu0 0.0
  %142 = vmatpush1.msra.mxu0 0.0
  %143 = vmatprep.subr.mxu0 0.0
  %144 = vmatpush1.msra.mxu0 0.0
  %145 = vmatprep.subr.mxu0 0.0
  %146 = vmatpush1.msra.mxu0 0.0
  %147 = vmatprep.subr.mxu0 0.0
  %148 = vmatpush1.msra.mxu0 0.0
  %149 = vmatprep.subr.mxu0 0.0
  %150 = vmatpush1.msra.mxu0 0.0
  %151 = vmatprep.subr.mxu0 0.0
  %152 = vmatpush1.msra.mxu0 0.0
  %153 = vmatprep.subr.mxu0 0.0
  %154 = vmatpush1.msra.mxu0 0.0
  %155 = vmatprep.subr.mxu0 0.0
  %156 = vmatpush1.msra.mxu0 0.0
  %157 = vmatprep.subr.mxu0 0.0
  %158 = vmatpush1.msra.mxu0 0.0
  %159 = vmatprep.subr.mxu0 0.0
  %160 = vmatpush1.msra.mxu0 0.0
  %161 = vmatprep.subr.mxu0 0.0
  %162 = vmatpush1.msra.mxu0 0.0
  %163 = vmatprep.subr.mxu0 0.0
  %164 = vmatpush1.msra.mxu0 0.0
  %165 = vmatprep.subr.mxu0 0.0
  %166 = vmatpush1.msra.mxu0 0.0
  %167 = vmatprep.subr.mxu0 0.0
  %168 = vmatpush1.msra.mxu0 0.0
  %169 = vmatprep.subr.mxu0 0.0
  %170 = vmatpush1.msra.mxu0 0.0
  %171 = vmatprep.subr.mxu0 0.0
  %172 = vmatpush1.msra.mxu0 0.0
  %173 = vmatprep.subr.mxu0 0.0
  %174 = vmatpush1.msra.mxu0 0.0
  %175 = vmatprep.subr.mxu0 0.0
  %176 = vmatpush1.msra.mxu0 0.0
  %177 = vmatprep.subr.mxu0 0.0
  %178 = vmatpush1.msra.mxu0 0.0
  %179 = vmatprep.subr.mxu0 0.0
  %180 = vmatpush1.msra.mxu0 0.0
  %181 = vmatprep.subr.mxu0 0.0
  %182 = vmatpush1.msra.mxu0 0.0
  %183 = vmatprep.subr.mxu0 0.0
  %184 = vmatpush1.msra.mxu0 0.0
  %185 = vmatprep.subr.mxu0 0.0
  %186 = vmatpush1.msra.mxu0 0.0
  %187 = vmatprep.subr.mxu0 0.0
  %188 = vmatpush1.msra.mxu0 0.0
  %189 = vmatprep.subr.mxu0 0.0
  %190 = vmatpush1.msra.mxu0 0.0
  %191 = vmatprep.subr.mxu0 0.0
  %192 = vmatpush1.msra.mxu0 0.0
  %193 = vmatprep.subr.mxu0 0.0
  %194 = vmatpush1.msra.mxu0 0.0
  %195 = vmatprep.subr.mxu0 0.0
  %196 = vmatpush1.msra.mxu0 0.0
  %197 = vmatprep.subr.mxu0 0.0
  %198 = vmatpush1.msra.mxu0 0.0
  %199 = vmatprep.subr.mxu0 0.0
  %200 = vmatpush1.msra.mxu0 0.0
  %201 = vmatprep.subr.mxu0 0.0
  %202 = vmatpush1.msra.mxu0 0.0
  %203 = vmatprep.mubr.f32.mxu0 0.0
  %204 = vmatmul.mubr.f32.gmra.mrb[0].mxu0 %v112
  %v205 = vpop.f32.mrb[0].mxu0
  %v206 = vadd.f32 0.0, %v205
  %v207 = vpop.f32.mrb[0].mxu0
  %208 = vmatprep.mubr.f32.mxu0 0.0
  %209 = vmatmul.mubr.f32.gmra.mrb[0].mxu0 %v115
  %v210 = vpop.f32.mrb[0].mxu0
  %v211 = vadd.f32 0.0, %v210
  %v212 = vpop.f32.mrb[0].mxu0
  %213 = vmatprep.mubr.f32.mxu0 0.0
  %214 = vmatmul.mubr.f32.gmra.mrb[0].mxu0 %v118
  %v215 = vpop.f32.mrb[0].mxu0
  %v216 = vadd.f32 0.0, %v215
  %v217 = vpop.f32.mrb[0].mxu0
  %218 = vmatprep.mubr.f32.mxu0 0.0
  %219 = vmatmul.mubr.f32.gmra.mrb[0].mxu0 %v121
  %v220 = vpop.f32.mrb[0].mxu0
  %v221 = vadd.f32 0.0, %v220
  %v222 = vpop.f32.mrb[0].mxu0
  %223 = vmatprep.mubr.f32.mxu0 0.0
  %224 = vmatmul.mubr.f32.gmra.mrb[0].mxu0 %v124
  %v225 = vpop.f32.mrb[0].mxu0
  %v226 = vadd.f32 0.0, %v225
  %v227 = vpop.f32.mrb[0].mxu0
  %228 = vmatprep.mubr.f32.mxu0 0.0
  %229 = vmatmul.mubr.f32.gmra.mrb[0].mxu0 %v127
  %v230 = vpop.f32.mrb[0].mxu0
  %v231 = vadd.f32 0.0, %v230
  %v232 = vpop.f32.mrb[0].mxu0
  %233 = vmatprep.mubr.f32.mxu0 0.0
  %234 = vmatmul.mubr.f32.gmra.mrb[0].mxu0 %v130
  %v235 = vpop.f32.mrb[0].mxu0
  %v236 = vadd.f32 0.0, %v235
  %v237 = vpop.f32.mrb[0].mxu0
  %238 = vmatprep.mubr.f32.mxu0 0.0
  %239 = vmatmul.mubr.f32.gmra.mrb[0].mxu0 %v133
  %v240 = vpop.f32.mrb[0].mxu0
  %v241 = vadd.f32 0.0, %v240
  %v242 = vpop.f32.mrb[0].mxu0
  %243 = vdwg.mxu0
  %v244 = vld [vmem:[%s3 + $0x10] sm:$0xff]
  %v245 = vld [vmem:[%s3 + $0x18] sm:$0xff]
  %v246 = vld [vmem:[%s3 + $0x20] sm:$0xff]
  %v247 = vld [vmem:[%s3 + $0x28] sm:$0xff]
  %v248 = vpack.c.bf16 %v245, %v244
  %v249 = vpack.c.bf16 %v247, %v246
  %v250 = vadd.f32 %v206, %v99
  %vm251 = vcmask 261120
  %v253 = vsel %vm251, 0, 0
  %255 = vmatprep.subr.bf16.mxu0 0
  %256 = vmatpush1.bf16.msra.mxu0 %v248
  %257 = vmatprep.subr.bf16.mxu0 0
  %258 = vmatpush1.bf16.msra.mxu0 %v249
  %259 = vmatprep.subr.bf16.mxu0 0
  %260 = vmatpush1.bf16.msra.mxu0 0
  %261 = vmatprep.subr.bf16.mxu0 0
  %262 = vmatpush1.bf16.msra.mxu0 0
  %263 = vmatprep.subr.bf16.mxu0 0
  %264 = vmatpush1.bf16.msra.mxu0 0
  %265 = vmatprep.subr.bf16.mxu0 0
  %266 = vmatpush1.bf16.msra.mxu0 0
  %267 = vmatprep.subr.bf16.mxu0 0
  %268 = vmatpush1.bf16.msra.mxu0 0
  %269 = vmatprep.subr.bf16.mxu0 0
  %270 = vmatpush1.bf16.msra.mxu0 0
  %271 = vmatprep.subr.bf16.mxu0 0
  %272 = vmatpush1.bf16.msra.mxu0 0
  %273 = vmatprep.subr.bf16.mxu0 0
  %274 = vmatpush1.bf16.msra.mxu0 0
  %275 = vmatprep.subr.bf16.mxu0 0
  %276 = vmatpush1.bf16.msra.mxu0 0
  %277 = vmatprep.subr.bf16.mxu0 0
  %278 = vmatpush1.bf16.msra.mxu0 0
  %279 = vmatprep.subr.bf16.mxu0 0
  %280 = vmatpush1.bf16.msra.mxu0 0
  %281 = vmatprep.subr.bf16.mxu0 0
  %282 = vmatpush1.bf16.msra.mxu0 0
  %283 = vmatprep.subr.bf16.mxu0 0
  %284 = vmatpush1.bf16.msra.mxu0 0
  %285 = vmatprep.subr.bf16.mxu0 0
  %286 = vmatpush1.bf16.msra.mxu0 0
  %287 = vmatprep.mubr.bf16.mxu0 0
  %288 = vmatmul.mubr.bf16.gmra.mrb[0].mxu0 %v253
  %v289 = vpop.f32.mrb[0].mxu0
  %v290 = vadd.f32 0.0, %v289
  %v291 = vpop.f32.mrb[0].mxu0
  %v292 = vpop.f32.mrb[0].mxu0
  %v293 = vpop.f32.mrb[0].mxu0
  %294 = vdwg.mxu0
  %v295 = vadd.f32 %v250, %v290
  %v296 = vxor.u32 %v295, 2147483648
  %v297 = vmul.f32 %v296, 1.442695
  %v298 = vpow.pop %v297
  %v299 = vadd.f32 %v298, 1.0
  %v300 = vrcp.pop %v299
  %v301 = vmul.f32 1.0, %v300
  %v302 = vmul.f32 %v301, 2.0
  %v303 = vsub.f32 %v302, 1.0
  %v304 = vmul.f32 %v301, 0.0
  %306 = vrot.lane.b32.xlu0 %v303, 64
  %v307 = vpop.permute.xlu0 %306
  %v309 = vmul.f32 %v301, %v307
  %311 = vrot.lane.b32.xlu0 %v309, 32
  %v312 = vpop.permute.xlu0 %311
  %v314 = vadd.f32 %v304, %v312
  %v315 = vtanh.pop %v314
  %317 = vrot.lane.b32.xlu0 %v315, 64
  %v318 = vpop.permute.xlu0 %317
  %v320 = vmul.f32 %v301, %v318
  %v321 = vadd.f32 %v211, %v99
  %v322 = vpack.c.bf16 %v320, %v320
  %324 = vrot.lane.b32.xlu0 %v322, 32
  %v325 = vpop.permute.xlu0 %324
  %v327 = vsel %vm251, %v325, 0
  %329 = vmatprep.subr.bf16.mxu0 0
  %330 = vmatpush1.bf16.msra.mxu0 %v248
  %331 = vmatprep.subr.bf16.mxu0 0
  %332 = vmatpush1.bf16.msra.mxu0 %v249
  %333 = vmatprep.subr.bf16.mxu0 0
  %334 = vmatpush1.bf16.msra.mxu0 0
  %335 = vmatprep.subr.bf16.mxu0 0
  %336 = vmatpush1.bf16.msra.mxu0 0
  %337 = vmatprep.subr.bf16.mxu0 0
  %338 = vmatpush1.bf16.msra.mxu0 0
  %339 = vmatprep.subr.bf16.mxu0 0
  %340 = vmatpush1.bf16.msra.mxu0 0
  %341 = vmatprep.subr.bf16.mxu0 0
  %342 = vmatpush1.bf16.msra.mxu0 0
  %343 = vmatprep.subr.bf16.mxu0 0
  %344 = vmatpush1.bf16.msra.mxu0 0
  %345 = vmatprep.subr.bf16.mxu0 0
  %346 = vmatpush1.bf16.msra.mxu0 0
  %347 = vmatprep.subr.bf16.mxu0 0
  %348 = vmatpush1.bf16.msra.mxu0 0
  %349 = vmatprep.subr.bf16.mxu0 0
  %350 = vmatpush1.bf16.msra.mxu0 0
  %351 = vmatprep.subr.bf16.mxu0 0
  %352 = vmatpush1.bf16.msra.mxu0 0
  %353 = vmatprep.subr.bf16.mxu0 0
  %354 = vmatpush1.bf16.msra.mxu0 0
  %355 = vmatprep.subr.bf16.mxu0 0
  %356 = vmatpush1.bf16.msra.mxu0 0
  %357 = vmatprep.subr.bf16.mxu0 0
  %358 = vmatpush1.bf16.msra.mxu0 0
  %359 = vmatprep.subr.bf16.mxu0 0
  %360 = vmatpush1.bf16.msra.mxu0 0
  %361 = vmatprep.mubr.bf16.mxu0 0
  %362 = vmatmul.mubr.bf16.gmra.mrb[0].mxu0 %v327
  %v363 = vpop.f32.mrb[0].mxu0
  %v364 = vadd.f32 0.0, %v363
  %v365 = vpop.f32.mrb[0].mxu0
  %v366 = vpop.f32.mrb[0].mxu0
  %v367 = vpop.f32.mrb[0].mxu0
  %368 = vdwg.mxu0
  %v369 = vadd.f32 %v321, %v364
  %v370 = vxor.u32 %v369, 2147483648
  %v371 = vmul.f32 %v370, 1.442695
  %v372 = vpow.pop %v371
  %v373 = vadd.f32 %v372, 1.0
  %v374 = vrcp.pop %v373
  %v375 = vmul.f32 1.0, %v374
  %v376 = vmul.f32 %v375, 2.0
  %v377 = vsub.f32 %v376, 1.0
  %v378 = vmul.f32 %v375, %v314
  %380 = vrot.lane.b32.xlu0 %v377, 64
  %v381 = vpop.permute.xlu0 %380
  %v383 = vmul.f32 %v375, %v381
  %385 = vrot.lane.b32.xlu0 %v383, 32
  %v386 = vpop.permute.xlu0 %385
  %v388 = vadd.f32 %v378, %v386
  %v389 = vtanh.pop %v388
  %391 = vrot.lane.b32.xlu0 %v389, 64
  %v392 = vpop.permute.xlu0 %391
  %v394 = vmul.f32 %v375, %v392
  %v395 = vadd.f32 %v216, %v99
  %v396 = vpack.c.bf16 %v394, %v394
  %398 = vrot.lane.b32.xlu0 %v396, 32
  %v399 = vpop.permute.xlu0 %398
  %v401 = vsel %vm251, %v399, 0
  %403 = vmatprep.subr.bf16.mxu0 0
  %404 = vmatpush1.bf16.msra.mxu0 %v248
  %405 = vmatprep.subr.bf16.mxu0 0
  %406 = vmatpush1.bf16.msra.mxu0 %v249
  %407 = vmatprep.subr.bf16.mxu0 0
  %408 = vmatpush1.bf16.msra.mxu0 0
  %409 = vmatprep.subr.bf16.mxu0 0
  %410 = vmatpush1.bf16.msra.mxu0 0
  %411 = vmatprep.subr.bf16.mxu0 0
  %412 = vmatpush1.bf16.msra.mxu0 0
  %413 = vmatprep.subr.bf16.mxu0 0
  %414 = vmatpush1.bf16.msra.mxu0 0
  %415 = vmatprep.subr.bf16.mxu0 0
  %416 = vmatpush1.bf16.msra.mxu0 0
  %417 = vmatprep.subr.bf16.mxu0 0
  %418 = vmatpush1.bf16.msra.mxu0 0
  %419 = vmatprep.subr.bf16.mxu0 0
  %420 = vmatpush1.bf16.msra.mxu0 0
  %421 = vmatprep.subr.bf16.mxu0 0
  %422 = vmatpush1.bf16.msra.mxu0 0
  %423 = vmatprep.subr.bf16.mxu0 0
  %424 = vmatpush1.bf16.msra.mxu0 0
  %425 = vmatprep.subr.bf16.mxu0 0
  %426 = vmatpush1.bf16.msra.mxu0 0
  %427 = vmatprep.subr.bf16.mxu0 0
  %428 = vmatpush1.bf16.msra.mxu0 0
  %429 = vmatprep.subr.bf16.mxu0 0
  %430 = vmatpush1.bf16.msra.mxu0 0
  %431 = vmatprep.subr.bf16.mxu0 0
  %432 = vmatpush1.bf16.msra.mxu0 0
  %433 = vmatprep.subr.bf16.mxu0 0
  %434 = vmatpush1.bf16.msra.mxu0 0
  %435 = vmatprep.mubr.bf16.mxu0 0
  %436 = vmatmul.mubr.bf16.gmra.mrb[0].mxu0 %v401
  %v437 = vpop.f32.mrb[0].mxu0
  %v438 = vadd.f32 0.0, %v437
  %v439 = vpop.f32.mrb[0].mxu0
  %v440 = vpop.f32.mrb[0].mxu0
  %v441 = vpop.f32.mrb[0].mxu0
  %442 = vdwg.mxu0
  %v443 = vadd.f32 %v395, %v438
  %v444 = vxor.u32 %v443, 2147483648
  %v445 = vmul.f32 %v444, 1.442695
  %v446 = vpow.pop %v445
  %v447 = vadd.f32 %v446, 1.0
  %v448 = vrcp.pop %v447
  %v449 = vmul.f32 1.0, %v448
  %v450 = vmul.f32 %v449, 2.0
  %v451 = vsub.f32 %v450, 1.0
  %v452 = vmul.f32 %v449, %v388
  %454 = vrot.lane.b32.xlu0 %v451, 64
  %v455 = vpop.permute.xlu0 %454
  %v457 = vmul.f32 %v449, %v455
  %459 = vrot.lane.b32.xlu0 %v457, 32
  %v460 = vpop.permute.xlu0 %459
  %v462 = vadd.f32 %v452, %v460
  %v463 = vtanh.pop %v462
  %465 = vrot.lane.b32.xlu0 %v463, 64
  %v466 = vpop.permute.xlu0 %465
  %v468 = vmul.f32 %v449, %v466
  %v469 = vadd.f32 %v221, %v99
  %v470 = vpack.c.bf16 %v468, %v468
  %472 = vrot.lane.b32.xlu0 %v470, 32
  %v473 = vpop.permute.xlu0 %472
  %v475 = vsel %vm251, %v473, 0
  %477 = vmatprep.subr.bf16.mxu0 0
  %478 = vmatpush1.bf16.msra.mxu0 %v248
  %479 = vmatprep.subr.bf16.mxu0 0
  %480 = vmatpush1.bf16.msra.mxu0 %v249
  %481 = vmatprep.subr.bf16.mxu0 0
  %482 = vmatpush1.bf16.msra.mxu0 0
  %483 = vmatprep.subr.bf16.mxu0 0
  %484 = vmatpush1.bf16.msra.mxu0 0
  %485 = vmatprep.subr.bf16.mxu0 0
  %486 = vmatpush1.bf16.msra.mxu0 0
  %487 = vmatprep.subr.bf16.mxu0 0
  %488 = vmatpush1.bf16.msra.mxu0 0
  %489 = vmatprep.subr.bf16.mxu0 0
  %490 = vmatpush1.bf16.msra.mxu0 0
  %491 = vmatprep.subr.bf16.mxu0 0
  %492 = vmatpush1.bf16.msra.mxu0 0
  %493 = vmatprep.subr.bf16.mxu0 0
  %494 = vmatpush1.bf16.msra.mxu0 0
  %495 = vmatprep.subr.bf16.mxu0 0
  %496 = vmatpush1.bf16.msra.mxu0 0
  %497 = vmatprep.subr.bf16.mxu0 0
  %498 = vmatpush1.bf16.msra.mxu0 0
  %499 = vmatprep.subr.bf16.mxu0 0
  %500 = vmatpush1.bf16.msra.mxu0 0
  %501 = vmatprep.subr.bf16.mxu0 0
  %502 = vmatpush1.bf16.msra.mxu0 0
  %503 = vmatprep.subr.bf16.mxu0 0
  %504 = vmatpush1.bf16.msra.mxu0 0
  %505 = vmatprep.subr.bf16.mxu0 0
  %506 = vmatpush1.bf16.msra.mxu0 0
  %507 = vmatprep.subr.bf16.mxu0 0
  %508 = vmatpush1.bf16.msra.mxu0 0
  %509 = vmatprep.mubr.bf16.mxu0 0
  %510 = vmatmul.mubr.bf16.gmra.mrb[0].mxu0 %v475
  %v511 = vpop.f32.mrb[0].mxu0
  %v512 = vadd.f32 0.0, %v511
  %v513 = vpop.f32.mrb[0].mxu0
  %v514 = vpop.f32.mrb[0].mxu0
  %v515 = vpop.f32.mrb[0].mxu0
  %516 = vdwg.mxu0
  %v517 = vadd.f32 %v469, %v512
  %v518 = vxor.u32 %v517, 2147483648
  %v519 = vmul.f32 %v518, 1.442695
  %v520 = vpow.pop %v519
  %v521 = vadd.f32 %v520, 1.0
  %v522 = vrcp.pop %v521
  %v523 = vmul.f32 1.0, %v522
  %v524 = vmul.f32 %v523, 2.0
  %v525 = vsub.f32 %v524, 1.0
  %v526 = vmul.f32 %v523, %v462
  %528 = vrot.lane.b32.xlu0 %v525, 64
  %v529 = vpop.permute.xlu0 %528
  %v531 = vmul.f32 %v523, %v529
  %533 = vrot.lane.b32.xlu0 %v531, 32
  %v534 = vpop.permute.xlu0 %533
  %v536 = vadd.f32 %v526, %v534
  %v537 = vtanh.pop %v536
  %539 = vrot.lane.b32.xlu0 %v537, 64
  %v540 = vpop.permute.xlu0 %539
  %v542 = vmul.f32 %v523, %v540
  %v543 = vadd.f32 %v226, %v99
  %v544 = vpack.c.bf16 %v542, %v542
  %546 = vrot.lane.b32.xlu0 %v544, 32
  %v547 = vpop.permute.xlu0 %546
  %v549 = vsel %vm251, %v547, 0
  %551 = vmatprep.subr.bf16.mxu0 0
  %552 = vmatpush1.bf16.msra.mxu0 %v248
  %553 = vmatprep.subr.bf16.mxu0 0
  %554 = vmatpush1.bf16.msra.mxu0 %v249
  %555 = vmatprep.subr.bf16.mxu0 0
  %556 = vmatpush1.bf16.msra.mxu0 0
  %557 = vmatprep.subr.bf16.mxu0 0
  %558 = vmatpush1.bf16.msra.mxu0 0
  %559 = vmatprep.subr.bf16.mxu0 0
  %560 = vmatpush1.bf16.msra.mxu0 0
  %561 = vmatprep.subr.bf16.mxu0 0
  %562 = vmatpush1.bf16.msra.mxu0 0
  %563 = vmatprep.subr.bf16.mxu0 0
  %564 = vmatpush1.bf16.msra.mxu0 0
  %565 = vmatprep.subr.bf16.mxu0 0
  %566 = vmatpush1.bf16.msra.mxu0 0
  %567 = vmatprep.subr.bf16.mxu0 0
  %568 = vmatpush1.bf16.msra.mxu0 0
  %569 = vmatprep.subr.bf16.mxu0 0
  %570 = vmatpush1.bf16.msra.mxu0 0
  %571 = vmatprep.subr.bf16.mxu0 0
  %572 = vmatpush1.bf16.msra.mxu0 0
  %573 = vmatprep.subr.bf16.mxu0 0
  %574 = vmatpush1.bf16.msra.mxu0 0
  %575 = vmatprep.subr.bf16.mxu0 0
  %576 = vmatpush1.bf16.msra.mxu0 0
  %577 = vmatprep.subr.bf16.mxu0 0
  %578 = vmatpush1.bf16.msra.mxu0 0
  %579 = vmatprep.subr.bf16.mxu0 0
  %580 = vmatpush1.bf16.msra.mxu0 0
  %581 = vmatprep.subr.bf16.mxu0 0
  %582 = vmatpush1.bf16.msra.mxu0 0
  %583 = vmatprep.mubr.bf16.mxu0 0
  %584 = vmatmul.mubr.bf16.gmra.mrb[0].mxu0 %v549
  %v585 = vpop.f32.mrb[0].mxu0
  %v586 = vadd.f32 0.0, %v585
  %v587 = vpop.f32.mrb[0].mxu0
  %v588 = vpop.f32.mrb[0].mxu0
  %v589 = vpop.f32.mrb[0].mxu0
  %590 = vdwg.mxu0
  %v591 = vadd.f32 %v543, %v586
  %v592 = vxor.u32 %v591, 2147483648
  %v593 = vmul.f32 %v592, 1.442695
  %v594 = vpow.pop %v593
  %v595 = vadd.f32 %v594, 1.0
  %v596 = vrcp.pop %v595
  %v597 = vmul.f32 1.0, %v596
  %v598 = vmul.f32 %v597, 2.0
  %v599 = vsub.f32 %v598, 1.0
  %v600 = vmul.f32 %v597, %v536
  %602 = vrot.lane.b32.xlu0 %v599, 64
  %v603 = vpop.permute.xlu0 %602
  %v605 = vmul.f32 %v597, %v603
  %607 = vrot.lane.b32.xlu0 %v605, 32
  %v608 = vpop.permute.xlu0 %607
  %v610 = vadd.f32 %v600, %v608
  %v611 = vtanh.pop %v610
  %613 = vrot.lane.b32.xlu0 %v611, 64
  %v614 = vpop.permute.xlu0 %613
  %v616 = vmul.f32 %v597, %v614
  %v617 = vadd.f32 %v231, %v99
  %v618 = vpack.c.bf16 %v616, %v616
  %620 = vrot.lane.b32.xlu0 %v618, 32
  %v621 = vpop.permute.xlu0 %620
  %v623 = vsel %vm251, %v621, 0
  %625 = vmatprep.subr.bf16.mxu0 0
  %626 = vmatpush1.bf16.msra.mxu0 %v248
  %627 = vmatprep.subr.bf16.mxu0 0
  %628 = vmatpush1.bf16.msra.mxu0 %v249
  %629 = vmatprep.subr.bf16.mxu0 0
  %630 = vmatpush1.bf16.msra.mxu0 0
  %631 = vmatprep.subr.bf16.mxu0 0
  %632 = vmatpush1.bf16.msra.mxu0 0
  %633 = vmatprep.subr.bf16.mxu0 0
  %634 = vmatpush1.bf16.msra.mxu0 0
  %635 = vmatprep.subr.bf16.mxu0 0
  %636 = vmatpush1.bf16.msra.mxu0 0
  %637 = vmatprep.subr.bf16.mxu0 0
  %638 = vmatpush1.bf16.msra.mxu0 0
  %639 = vmatprep.subr.bf16.mxu0 0
  %640 = vmatpush1.bf16.msra.mxu0 0
  %641 = vmatprep.subr.bf16.mxu0 0
  %642 = vmatpush1.bf16.msra.mxu0 0
  %643 = vmatprep.subr.bf16.mxu0 0
  %644 = vmatpush1.bf16.msra.mxu0 0
  %645 = vmatprep.subr.bf16.mxu0 0
  %646 = vmatpush1.bf16.msra.mxu0 0
  %647 = vmatprep.subr.bf16.mxu0 0
  %648 = vmatpush1.bf16.msra.mxu0 0
  %649 = vmatprep.subr.bf16.mxu0 0
  %650 = vmatpush1.bf16.msra.mxu0 0
  %651 = vmatprep.subr.bf16.mxu0 0
  %652 = vmatpush1.bf16.msra.mxu0 0
  %653 = vmatprep.subr.bf16.mxu0 0
  %654 = vmatpush1.bf16.msra.mxu0 0
  %655 = vmatprep.subr.bf16.mxu0 0
  %656 = vmatpush1.bf16.msra.mxu0 0
  %657 = vmatprep.mubr.bf16.mxu0 0
  %658 = vmatmul.mubr.bf16.gmra.mrb[0].mxu0 %v623
  %v659 = vpop.f32.mrb[0].mxu0
  %v660 = vadd.f32 0.0, %v659
  %v661 = vpop.f32.mrb[0].mxu0
  %v662 = vpop.f32.mrb[0].mxu0
  %v663 = vpop.f32.mrb[0].mxu0
  %664 = vdwg.mxu0
  %v665 = vadd.f32 %v617, %v660
  %v666 = vxor.u32 %v665, 2147483648
  %v667 = vmul.f32 %v666, 1.442695
  %v668 = vpow.pop %v667
  %v669 = vadd.f32 %v668, 1.0
  %v670 = vrcp.pop %v669
  %v671 = vmul.f32 1.0, %v670
  %v672 = vmul.f32 %v671, 2.0
  %v673 = vsub.f32 %v672, 1.0
  %v674 = vmul.f32 %v671, %v610
  %676 = vrot.lane.b32.xlu0 %v673, 64
  %v677 = vpop.permute.xlu0 %676
  %v679 = vmul.f32 %v671, %v677
  %681 = vrot.lane.b32.xlu0 %v679, 32
  %v682 = vpop.permute.xlu0 %681
  %v684 = vadd.f32 %v674, %v682
  %v685 = vtanh.pop %v684
  %687 = vrot.lane.b32.xlu0 %v685, 64
  %v688 = vpop.permute.xlu0 %687
  %v690 = vmul.f32 %v671, %v688
  %v691 = vadd.f32 %v236, %v99
  %v692 = vpack.c.bf16 %v690, %v690
  %694 = vrot.lane.b32.xlu0 %v692, 32
  %v695 = vpop.permute.xlu0 %694
  %v697 = vsel %vm251, %v695, 0
  %699 = vmatprep.subr.bf16.mxu0 0
  %700 = vmatpush1.bf16.msra.mxu0 %v248
  %701 = vmatprep.subr.bf16.mxu0 0
  %702 = vmatpush1.bf16.msra.mxu0 %v249
  %703 = vmatprep.subr.bf16.mxu0 0
  %704 = vmatpush1.bf16.msra.mxu0 0
  %705 = vmatprep.subr.bf16.mxu0 0
  %706 = vmatpush1.bf16.msra.mxu0 0
  %707 = vmatprep.subr.bf16.mxu0 0
  %708 = vmatpush1.bf16.msra.mxu0 0
  %709 = vmatprep.subr.bf16.mxu0 0
  %710 = vmatpush1.bf16.msra.mxu0 0
  %711 = vmatprep.subr.bf16.mxu0 0
  %712 = vmatpush1.bf16.msra.mxu0 0
  %713 = vmatprep.subr.bf16.mxu0 0
  %714 = vmatpush1.bf16.msra.mxu0 0
  %715 = vmatprep.subr.bf16.mxu0 0
  %716 = vmatpush1.bf16.msra.mxu0 0
  %717 = vmatprep.subr.bf16.mxu0 0
  %718 = vmatpush1.bf16.msra.mxu0 0
  %719 = vmatprep.subr.bf16.mxu0 0
  %720 = vmatpush1.bf16.msra.mxu0 0
  %721 = vmatprep.subr.bf16.mxu0 0
  %722 = vmatpush1.bf16.msra.mxu0 0
  %723 = vmatprep.subr.bf16.mxu0 0
  %724 = vmatpush1.bf16.msra.mxu0 0
  %725 = vmatprep.subr.bf16.mxu0 0
  %726 = vmatpush1.bf16.msra.mxu0 0
  %727 = vmatprep.subr.bf16.mxu0 0
  %728 = vmatpush1.bf16.msra.mxu0 0
  %729 = vmatprep.subr.bf16.mxu0 0
  %730 = vmatpush1.bf16.msra.mxu0 0
  %731 = vmatprep.mubr.bf16.mxu0 0
  %732 = vmatmul.mubr.bf16.gmra.mrb[0].mxu0 %v697
  %v733 = vpop.f32.mrb[0].mxu0
  %v734 = vadd.f32 0.0, %v733
  %v735 = vpop.f32.mrb[0].mxu0
  %v736 = vpop.f32.mrb[0].mxu0
  %v737 = vpop.f32.mrb[0].mxu0
  %738 = vdwg.mxu0
  %v739 = vadd.f32 %v691, %v734
  %v740 = vxor.u32 %v739, 2147483648
  %v741 = vmul.f32 %v740, 1.442695
  %v742 = vpow.pop %v741
  %v743 = vadd.f32 %v742, 1.0
  %v744 = vrcp.pop %v743
  %v745 = vmul.f32 1.0, %v744
  %v746 = vmul.f32 %v745, 2.0
  %v747 = vsub.f32 %v746, 1.0
  %v748 = vmul.f32 %v745, %v684
  %750 = vrot.lane.b32.xlu0 %v747, 64
  %v751 = vpop.permute.xlu0 %750
  %v753 = vmul.f32 %v745, %v751
  %755 = vrot.lane.b32.xlu0 %v753, 32
  %v756 = vpop.permute.xlu0 %755
  %v758 = vadd.f32 %v748, %v756
  %v759 = vtanh.pop %v758
  %761 = vrot.lane.b32.xlu0 %v759, 64
  %v762 = vpop.permute.xlu0 %761
  %v764 = vmul.f32 %v745, %v762
  %v765 = vadd.f32 %v241, %v99
  %v766 = vpack.c.bf16 %v764, %v764
  %768 = vrot.lane.b32.xlu0 %v766, 32
  %v769 = vpop.permute.xlu0 %768
  %v771 = vsel %vm251, %v769, 0
  %773 = vmatprep.subr.bf16.mxu0 0
  %774 = vmatpush1.bf16.msra.mxu0 %v248
  %775 = vmatprep.subr.bf16.mxu0 0
  %776 = vmatpush1.bf16.msra.mxu0 %v249
  %777 = vmatprep.subr.bf16.mxu0 0
  %778 = vmatpush1.bf16.msra.mxu0 0
  %779 = vmatprep.subr.bf16.mxu0 0
  %780 = vmatpush1.bf16.msra.mxu0 0
  %781 = vmatprep.subr.bf16.mxu0 0
  %782 = vmatpush1.bf16.msra.mxu0 0
  %783 = vmatprep.subr.bf16.mxu0 0
  %784 = vmatpush1.bf16.msra.mxu0 0
  %785 = vmatprep.subr.bf16.mxu0 0
  %786 = vmatpush1.bf16.msra.mxu0 0
  %787 = vmatprep.subr.bf16.mxu0 0
  %788 = vmatpush1.bf16.msra.mxu0 0
  %789 = vmatprep.subr.bf16.mxu0 0
  %790 = vmatpush1.bf16.msra.mxu0 0
  %791 = vmatprep.subr.bf16.mxu0 0
  %792 = vmatpush1.bf16.msra.mxu0 0
  %793 = vmatprep.subr.bf16.mxu0 0
  %794 = vmatpush1.bf16.msra.mxu0 0
  %795 = vmatprep.subr.bf16.mxu0 0
  %796 = vmatpush1.bf16.msra.mxu0 0
  %797 = vmatprep.subr.bf16.mxu0 0
  %798 = vmatpush1.bf16.msra.mxu0 0
  %799 = vmatprep.subr.bf16.mxu0 0
  %800 = vmatpush1.bf16.msra.mxu0 0
  %801 = vmatprep.subr.bf16.mxu0 0
  %802 = vmatpush1.bf16.msra.mxu0 0
  %803 = vmatprep.subr.bf16.mxu0 0
  %804 = vmatpush1.bf16.msra.mxu0 0
  %805 = vmatprep.mubr.bf16.mxu0 0
  %806 = vmatmul.mubr.bf16.gmra.mrb[0].mxu0 %v771
  %v807 = vpop.f32.mrb[0].mxu0
  %v808 = vadd.f32 0.0, %v807
  %v809 = vpop.f32.mrb[0].mxu0
  %v810 = vpop.f32.mrb[0].mxu0
  %v811 = vpop.f32.mrb[0].mxu0
  %812 = vdwg.mxu0
  %v813 = vadd.f32 %v765, %v808
  %v814 = vxor.u32 %v813, 2147483648
  %v815 = vmul.f32 %v814, 1.442695
  %v816 = vpow.pop %v815
  %v817 = vadd.f32 %v816, 1.0
  %v818 = vrcp.pop %v817
  %v819 = vmul.f32 1.0, %v818
  %v820 = vmul.f32 %v819, 2.0
  %v821 = vsub.f32 %v820, 1.0
  %v822 = vmul.f32 %v819, %v758
  %824 = vrot.lane.b32.xlu0 %v821, 64
  %v825 = vpop.permute.xlu0 %824
  %v827 = vmul.f32 %v819, %v825
  %829 = vrot.lane.b32.xlu0 %v827, 32
  %v830 = vpop.permute.xlu0 %829
  %v832 = vadd.f32 %v822, %v830
  %v833 = vtanh.pop %v832
  %835 = vrot.lane.b32.xlu0 %v833, 64
  %v836 = vpop.permute.xlu0 %835
  %v838 = vmul.f32 %v819, %v836
  %v839 = vld [vmem:[%s3 + $0x38] sm:$0xff]
  %v840 = vld [vmem:[%s3 + $0x40] sm:$0xff]
  %v841 = vld [vmem:[%s3 + $0x48] sm:$0xff]
  %v842 = vld [vmem:[%s3 + $0x50] sm:$0xff]
  %v843 = vld [vmem:[%s3 + $0x58] sm:$0x1]
  %v844 = vlaneseq
  %v845 = vshrl.u32 %v844, 7
  %v846 = vsub.s32 0, %v845
  %v847 = vrot.slane %v843, %v846
  %849 = vrot.lane.b32.xlu0 %v838, 32
  %v850 = vpop.permute.xlu0 %849
  %v851 = vsel %vm251, %v850, 0
  %853 = vmatprep.subr.mxu0 0.0
  %854 = vmatpush1.msra.mxu0 %v839
  %855 = vmatprep.subr.mxu0 0.0
  %856 = vmatpush1.msra.mxu0 %v840
  %857 = vmatprep.subr.mxu0 0.0
  %858 = vmatpush1.msra.mxu0 %v841
  %859 = vmatprep.subr.mxu0 0.0
  %860 = vmatpush1.msra.mxu0 %v842
  %861 = vmatprep.subr.mxu0 0.0
  %862 = vmatpush1.msra.mxu0 0.0
  %863 = vmatprep.subr.mxu0 0.0
  %864 = vmatpush1.msra.mxu0 0.0
  %865 = vmatprep.subr.mxu0 0.0
  %866 = vmatpush1.msra.mxu0 0.0
  %867 = vmatprep.subr.mxu0 0.0
  %868 = vmatpush1.msra.mxu0 0.0
  %869 = vmatprep.subr.mxu0 0.0
  %870 = vmatpush1.msra.mxu0 0.0
  %871 = vmatprep.subr.mxu0 0.0
  %872 = vmatpush1.msra.mxu0 0.0
  %873 = vmatprep.subr.mxu0 0.0
  %874 = vmatpush1.msra.mxu0 0.0
  %875 = vmatprep.subr.mxu0 0.0
  %876 = vmatpush1.msra.mxu0 0.0
  %877 = vmatprep.subr.mxu0 0.0
  %878 = vmatpush1.msra.mxu0 0.0
  %879 = vmatprep.subr.mxu0 0.0
  %880 = vmatpush1.msra.mxu0 0.0
  %881 = vmatprep.subr.mxu0 0.0
  %882 = vmatpush1.msra.mxu0 0.0
  %883 = vmatprep.subr.mxu0 0.0
  %884 = vmatpush1.msra.mxu0 0.0
  %885 = vmatprep.subr.mxu0 0.0
  %886 = vmatpush1.msra.mxu0 0.0
  %887 = vmatprep.subr.mxu0 0.0
  %888 = vmatpush1.msra.mxu0 0.0
  %889 = vmatprep.subr.mxu0 0.0
  %890 = vmatpush1.msra.mxu0 0.0
  %891 = vmatprep.subr.mxu0 0.0
  %892 = vmatpush1.msra.mxu0 0.0
  %893 = vmatprep.subr.mxu0 0.0
  %894 = vmatpush1.msra.mxu0 0.0
  %895 = vmatprep.subr.mxu0 0.0
  %896 = vmatpush1.msra.mxu0 0.0
  %897 = vmatprep.subr.mxu0 0.0
  %898 = vmatpush1.msra.mxu0 0.0
  %899 = vmatprep.subr.mxu0 0.0
  %900 = vmatpush1.msra.mxu0 0.0
  %901 = vmatprep.subr.mxu0 0.0
  %902 = vmatpush1.msra.mxu0 0.0
  %903 = vmatprep.subr.mxu0 0.0
  %904 = vmatpush1.msra.mxu0 0.0
  %905 = vmatprep.subr.mxu0 0.0
  %906 = vmatpush1.msra.mxu0 0.0
  %907 = vmatprep.subr.mxu0 0.0
  %908 = vmatpush1.msra.mxu0 0.0
  %909 = vmatprep.subr.mxu0 0.0
  %910 = vmatpush1.msra.mxu0 0.0
  %911 = vmatprep.subr.mxu0 0.0
  %912 = vmatpush1.msra.mxu0 0.0
  %913 = vmatprep.subr.mxu0 0.0
  %914 = vmatpush1.msra.mxu0 0.0
  %915 = vmatprep.subr.mxu0 0.0
  %916 = vmatpush1.msra.mxu0 0.0
  %917 = vmatprep.mubr.f32.mxu0 0.0
  %918 = vmatmul.mubr.f32.gmra.mrb[0].mxu0 %v851
  %v919 = vpop.f32.mrb[0].mxu0
  %v920 = vadd.f32 %v847, %v919
  %v921 = vpop.f32.mrb[0].mxu0
  %922 = vdwg.mxu0
  %923 = vst [vmem:[%s5] sm:$0xff] %v920
  %v924 = vld [vmem:[%s2] sm:$0xff]
  %v925 = vmul.f32 %v920, 0.5
  %v926 = vmul.f32 %v925, 1.442695
  %v927 = vpow.pop %v926
  %929 = vrot.lane.b32.xlu0 %v927, 112
  %v930 = vpop.permute.xlu0 %929
  %v932 = vmul.f32 %v924, %v930
  %v933 = vadd.f32 %v920, %v932
  %v934 = vld [vmem:[%s3 + $0x60] sm:$0xff]
  %v935 = vld [vmem:[%s3 + $0x68] sm:$0xff]
  %v936 = vld [vmem:[%s3 + $0x70] sm:$0xff]
  %vm937 = vcmask 130048
  %v939 = vsel %vm937, %v933, 0
  %941 = vmatprep.subr.mxu0 0.0
  %942 = vmatpush1.msra.mxu0 %v935
  %943 = vmatprep.subr.mxu0 0.0
  %944 = vmatpush1.msra.mxu0 %v936
  %945 = vmatprep.subr.mxu0 0.0
  %946 = vmatpush1.msra.mxu0 0.0
  %947 = vmatprep.subr.mxu0 0.0
  %948 = vmatpush1.msra.mxu0 0.0
  %949 = vmatprep.subr.mxu0 0.0
  %950 = vmatpush1.msra.mxu0 0.0
  %951 = vmatprep.subr.mxu0 0.0
  %952 = vmatpush1.msra.mxu0 0.0
  %953 = vmatprep.subr.mxu0 0.0
  %954 = vmatpush1.msra.mxu0 0.0
  %955 = vmatprep.subr.mxu0 0.0
  %956 = vmatpush1.msra.mxu0 0.0
  %957 = vmatprep.subr.mxu0 0.0
  %958 = vmatpush1.msra.mxu0 0.0
  %959 = vmatprep.subr.mxu0 0.0
  %960 = vmatpush1.msra.mxu0 0.0
  %961 = vmatprep.subr.mxu0 0.0
  %962 = vmatpush1.msra.mxu0 0.0
  %963 = vmatprep.subr.mxu0 0.0
  %964 = vmatpush1.msra.mxu0 0.0
  %965 = vmatprep.subr.mxu0 0.0
  %966 = vmatpush1.msra.mxu0 0.0
  %967 = vmatprep.subr.mxu0 0.0
  %968 = vmatpush1.msra.mxu0 0.0
  %969 = vmatprep.subr.mxu0 0.0
  %970 = vmatpush1.msra.mxu0 0.0
  %971 = vmatprep.subr.mxu0 0.0
  %972 = vmatpush1.msra.mxu0 0.0
  %973 = vmatprep.subr.mxu0 0.0
  %974 = vmatpush1.msra.mxu0 0.0
  %975 = vmatprep.subr.mxu0 0.0
  %976 = vmatpush1.msra.mxu0 0.0
  %977 = vmatprep.subr.mxu0 0.0
  %978 = vmatpush1.msra.mxu0 0.0
  %979 = vmatprep.subr.mxu0 0.0
  %980 = vmatpush1.msra.mxu0 0.0
  %981 = vmatprep.subr.mxu0 0.0
  %982 = vmatpush1.msra.mxu0 0.0
  %983 = vmatprep.subr.mxu0 0.0
  %984 = vmatpush1.msra.mxu0 0.0
  %985 = vmatprep.subr.mxu0 0.0
  %986 = vmatpush1.msra.mxu0 0.0
  %987 = vmatprep.subr.mxu0 0.0
  %988 = vmatpush1.msra.mxu0 0.0
  %989 = vmatprep.subr.mxu0 0.0
  %990 = vmatpush1.msra.mxu0 0.0
  %991 = vmatprep.subr.mxu0 0.0
  %992 = vmatpush1.msra.mxu0 0.0
  %993 = vmatprep.subr.mxu0 0.0
  %994 = vmatpush1.msra.mxu0 0.0
  %995 = vmatprep.subr.mxu0 0.0
  %996 = vmatpush1.msra.mxu0 0.0
  %997 = vmatprep.subr.mxu0 0.0
  %998 = vmatpush1.msra.mxu0 0.0
  %999 = vmatprep.subr.mxu0 0.0
  %1000 = vmatpush1.msra.mxu0 0.0
  %1001 = vmatprep.subr.mxu0 0.0
  %1002 = vmatpush1.msra.mxu0 0.0
  %1003 = vmatprep.subr.mxu0 0.0
  %1004 = vmatpush1.msra.mxu0 0.0
  %1005 = vmatprep.mubr.f32.mxu0 0.0
  %1006 = vmatmul.mubr.f32.gmra.mrb[0].mxu0 %v939
  %v1007 = vpop.f32.mrb[0].mxu0
  %v1008 = vadd.f32 0.0, %v1007
  %v1009 = vpop.f32.mrb[0].mxu0
  %1010 = vdwg.mxu0
  %1011 = vmatprep.subr.mxu0 0.0
  %1012 = vmatpush1.msra.mxu0 %v934
  %1013 = vmatprep.subr.mxu0 0.0
  %1014 = vmatpush1.msra.mxu0 0.0
  %1015 = vmatprep.subr.mxu0 0.0
  %1016 = vmatpush1.msra.mxu0 0.0
  %1017 = vmatprep.subr.mxu0 0.0
  %1018 = vmatpush1.msra.mxu0 0.0
  %1019 = vmatprep.subr.mxu0 0.0
  %1020 = vmatpush1.msra.mxu0 0.0
  %1021 = vmatprep.subr.mxu0 0.0
  %1022 = vmatpush1.msra.mxu0 0.0
  %1023 = vmatprep.subr.mxu0 0.0
  %1024 = vmatpush1.msra.mxu0 0.0
  %1025 = vmatprep.subr.mxu0 0.0
  %1026 = vmatpush1.msra.mxu0 0.0
  %1027 = vmatprep.subr.mxu0 0.0
  %1028 = vmatpush1.msra.mxu0 0.0
  %1029 = vmatprep.subr.mxu0 0.0
  %1030 = vmatpush1.msra.mxu0 0.0
  %1031 = vmatprep.subr.mxu0 0.0
  %1032 = vmatpush1.msra.mxu0 0.0
  %1033 = vmatprep.subr.mxu0 0.0
  %1034 = vmatpush1.msra.mxu0 0.0
  %1035 = vmatprep.subr.mxu0 0.0
  %1036 = vmatpush1.msra.mxu0 0.0
  %1037 = vmatprep.subr.mxu0 0.0
  %1038 = vmatpush1.msra.mxu0 0.0
  %1039 = vmatprep.subr.mxu0 0.0
  %1040 = vmatpush1.msra.mxu0 0.0
  %1041 = vmatprep.subr.mxu0 0.0
  %1042 = vmatpush1.msra.mxu0 0.0
  %1043 = vmatprep.subr.mxu0 0.0
  %1044 = vmatpush1.msra.mxu0 0.0
  %1045 = vmatprep.subr.mxu0 0.0
  %1046 = vmatpush1.msra.mxu0 0.0
  %1047 = vmatprep.subr.mxu0 0.0
  %1048 = vmatpush1.msra.mxu0 0.0
  %1049 = vmatprep.subr.mxu0 0.0
  %1050 = vmatpush1.msra.mxu0 0.0
  %1051 = vmatprep.subr.mxu0 0.0
  %1052 = vmatpush1.msra.mxu0 0.0
  %1053 = vmatprep.subr.mxu0 0.0
  %1054 = vmatpush1.msra.mxu0 0.0
  %1055 = vmatprep.subr.mxu0 0.0
  %1056 = vmatpush1.msra.mxu0 0.0
  %1057 = vmatprep.subr.mxu0 0.0
  %1058 = vmatpush1.msra.mxu0 0.0
  %1059 = vmatprep.subr.mxu0 0.0
  %1060 = vmatpush1.msra.mxu0 0.0
  %1061 = vmatprep.subr.mxu0 0.0
  %1062 = vmatpush1.msra.mxu0 0.0
  %1063 = vmatprep.subr.mxu0 0.0
  %1064 = vmatpush1.msra.mxu0 0.0
  %1065 = vmatprep.subr.mxu0 0.0
  %1066 = vmatpush1.msra.mxu0 0.0
  %1067 = vmatprep.subr.mxu0 0.0
  %1068 = vmatpush1.msra.mxu0 0.0
  %1069 = vmatprep.subr.mxu0 0.0
  %1070 = vmatpush1.msra.mxu0 0.0
  %1071 = vmatprep.subr.mxu0 0.0
  %1072 = vmatpush1.msra.mxu0 0.0
  %1073 = vmatprep.subr.mxu0 0.0
  %1074 = vmatpush1.msra.mxu0 0.0
  %1075 = vmatprep.mubr.f32.mxu0 0.0
  %1076 = vmatmul.mubr.f32.gmra.mrb[0].mxu0 %v30
  %v1077 = vpop.f32.mrb[0].mxu0
  %v1078 = vadd.f32 %v1008, %v1077
  %v1079 = vpop.f32.mrb[0].mxu0
  %1080 = vdwg.mxu0
  %v1081 = vld [vmem:[%s3 + $0x98] sm:$0x1]
  %v1082 = vlaneseq
  %v1083 = vshrl.u32 %v1082, 7
  %v1084 = vsub.s32 0, %v1083
  %v1085 = vrot.slane %v1081, %v1084
  %v1086 = vadd.f32 %v1078, %v1085
  %v1087 = vld [vmem:[%s3 + $0x78] sm:$0xff]
  %v1088 = vld [vmem:[%s3 + $0x80] sm:$0xff]
  %v1089 = vld [vmem:[%s3 + $0x88] sm:$0xff]
  %v1090 = vld [vmem:[%s3 + $0x90] sm:$0xff]
  %v1091 = vpack.c.bf16 %v1088, %v1087
  %v1092 = vpack.c.bf16 %v1090, %v1089
  %1093 = vmatprep.subr.bf16.mxu0 0
  %1094 = vmatpush1.bf16.msra.mxu0 %v1091
  %1095 = vmatprep.subr.bf16.mxu0 0
  %1096 = vmatpush1.bf16.msra.mxu0 %v1092
  %1097 = vmatprep.subr.bf16.mxu0 0
  %1098 = vmatpush1.bf16.msra.mxu0 0
  %1099 = vmatprep.subr.bf16.mxu0 0
  %1100 = vmatpush1.bf16.msra.mxu0 0
  %1101 = vmatprep.subr.bf16.mxu0 0
  %1102 = vmatpush1.bf16.msra.mxu0 0
  %1103 = vmatprep.subr.bf16.mxu0 0
  %1104 = vmatpush1.bf16.msra.mxu0 0
  %1105 = vmatprep.subr.bf16.mxu0 0
  %1106 = vmatpush1.bf16.msra.mxu0 0
  %1107 = vmatprep.subr.bf16.mxu0 0
  %1108 = vmatpush1.bf16.msra.mxu0 0
  %1109 = vmatprep.subr.bf16.mxu0 0
  %1110 = vmatpush1.bf16.msra.mxu0 0
  %1111 = vmatprep.subr.bf16.mxu0 0
  %1112 = vmatpush1.bf16.msra.mxu0 0
  %1113 = vmatprep.subr.bf16.mxu0 0
  %1114 = vmatpush1.bf16.msra.mxu0 0
  %1115 = vmatprep.subr.bf16.mxu0 0
  %1116 = vmatpush1.bf16.msra.mxu0 0
  %1117 = vmatprep.subr.bf16.mxu0 0
  %1118 = vmatpush1.bf16.msra.mxu0 0
  %1119 = vmatprep.subr.bf16.mxu0 0
  %1120 = vmatpush1.bf16.msra.mxu0 0
  %1121 = vmatprep.subr.bf16.mxu0 0
  %1122 = vmatpush1.bf16.msra.mxu0 0
  %1123 = vmatprep.subr.bf16.mxu0 0
  %1124 = vmatpush1.bf16.msra.mxu0 0
  %1125 = vmatprep.mubr.bf16.mxu0 0
  %1126 = vmatmul.mubr.bf16.gmra.mrb[0].mxu0 %v253
  %v1127 = vpop.f32.mrb[0].mxu0
  %v1128 = vadd.f32 0.0, %v1127
  %v1129 = vpop.f32.mrb[0].mxu0
  %v1130 = vpop.f32.mrb[0].mxu0
  %v1131 = vpop.f32.mrb[0].mxu0
  %1132 = vdwg.mxu0
  %v1133 = vadd.f32 %v1086, %v1128
  %v1134 = vxor.u32 %v1133, 2147483648
  %v1135 = vmul.f32 %v1134, 1.442695
  %v1136 = vpow.pop %v1135
  %v1137 = vadd.f32 %v1136, 1.0
  %v1138 = vrcp.pop %v1137
  %v1139 = vmul.f32 1.0, %v1138
  %v1140 = vmul.f32 %v1139, 2.0
  %v1141 = vsub.f32 %v1140, 1.0
  %v1142 = vmul.f32 %v1139, 0.0
  %1144 = vrot.lane.b32.xlu0 %v1141, 64
  %v1145 = vpop.permute.xlu0 %1144
  %v1147 = vmul.f32 %v1139, %v1145
  %1149 = vrot.lane.b32.xlu0 %v1147, 32
  %v1150 = vpop.permute.xlu0 %1149
  %v1152 = vadd.f32 %v1142, %v1150
  %v1153 = vtanh.pop %v1152
  %1155 = vrot.lane.b32.xlu0 %v1153, 64
  %v1156 = vpop.permute.xlu0 %1155
  %v1158 = vmul.f32 %v1139, %v1156
  %1160 = vrot.lane.b32.xlu0 %v1158, 32
  %v1161 = vpop.permute.xlu0 %1160
  %1163 = vst.msk [vmem:[#allocation2] sm:$0xff] %vm251, %v1161
  %v1164 = vpack.c.bf16 %v1158, %v1158
  %1166 = vrot.lane.b32.xlu0 %v1164, 32
  %v1167 = vpop.permute.xlu0 %1166
  %v1169 = vsel %vm251, %v1167, 0
  %1171 = vmatprep.subr.bf16.mxu0 0
  %1172 = vmatpush1.bf16.msra.mxu0 %v1091
  %1173 = vmatprep.subr.bf16.mxu0 0
  %1174 = vmatpush1.bf16.msra.mxu0 %v1092
  %1175 = vmatprep.subr.bf16.mxu0 0
  %1176 = vmatpush1.bf16.msra.mxu0 0
  %1177 = vmatprep.subr.bf16.mxu0 0
  %1178 = vmatpush1.bf16.msra.mxu0 0
  %1179 = vmatprep.subr.bf16.mxu0 0
  %1180 = vmatpush1.bf16.msra.mxu0 0
  %1181 = vmatprep.subr.bf16.mxu0 0
  %1182 = vmatpush1.bf16.msra.mxu0 0
  %1183 = vmatprep.subr.bf16.mxu0 0
  %1184 = vmatpush1.bf16.msra.mxu0 0
  %1185 = vmatprep.subr.bf16.mxu0 0
  %1186 = vmatpush1.bf16.msra.mxu0 0
  %1187 = vmatprep.subr.bf16.mxu0 0
  %1188 = vmatpush1.bf16.msra.mxu0 0
  %1189 = vmatprep.subr.bf16.mxu0 0
  %1190 = vmatpush1.bf16.msra.mxu0 0
  %1191 = vmatprep.subr.bf16.mxu0 0
  %1192 = vmatpush1.bf16.msra.mxu0 0
  %1193 = vmatprep.subr.bf16.mxu0 0
  %1194 = vmatpush1.bf16.msra.mxu0 0
  %1195 = vmatprep.subr.bf16.mxu0 0
  %1196 = vmatpush1.bf16.msra.mxu0 0
  %1197 = vmatprep.subr.bf16.mxu0 0
  %1198 = vmatpush1.bf16.msra.mxu0 0
  %1199 = vmatprep.subr.bf16.mxu0 0
  %1200 = vmatpush1.bf16.msra.mxu0 0
  %1201 = vmatprep.subr.bf16.mxu0 0
  %1202 = vmatpush1.bf16.msra.mxu0 0
  %1203 = vmatprep.mubr.bf16.mxu0 0
  %1204 = vmatmul.mubr.bf16.gmra.mrb[0].mxu0 %v1169
  %v1205 = vpop.f32.mrb[0].mxu0
  %v1206 = vadd.f32 0.0, %v1205
  %v1207 = vpop.f32.mrb[0].mxu0
  %v1208 = vpop.f32.mrb[0].mxu0
  %v1209 = vpop.f32.mrb[0].mxu0
  %1210 = vdwg.mxu0
  %v1211 = vadd.f32 %v1086, %v1206
  %v1212 = vxor.u32 %v1211, 2147483648
  %v1213 = vmul.f32 %v1212, 1.442695
  %v1214 = vpow.pop %v1213
  %v1215 = vadd.f32 %v1214, 1.0
  %v1216 = vrcp.pop %v1215
  %v1217 = vmul.f32 1.0, %v1216
  %v1218 = vmul.f32 %v1217, 2.0
  %v1219 = vsub.f32 %v1218, 1.0
  %v1220 = vmul.f32 %v1217, %v1152
  %1222 = vrot.lane.b32.xlu0 %v1219, 64
  %v1223 = vpop.permute.xlu0 %1222
  %v1225 = vmul.f32 %v1217, %v1223
  %1227 = vrot.lane.b32.xlu0 %v1225, 32
  %v1228 = vpop.permute.xlu0 %1227
  %v1230 = vadd.f32 %v1220, %v1228
  %v1231 = vtanh.pop %v1230
  %1233 = vrot.lane.b32.xlu0 %v1231, 64
  %v1234 = vpop.permute.xlu0 %1233
  %v1236 = vmul.f32 %v1217, %v1234
  %1238 = vrot.lane.b32.xlu0 %v1236, 32
  %v1239 = vpop.permute.xlu0 %1238
  %1241 = vst.msk [vmem:[#allocation2 + $0x8] sm:$0xff] %vm251, %v1239
  %v1242 = vpack.c.bf16 %v1236, %v1236
  %1244 = vrot.lane.b32.xlu0 %v1242, 32
  %v1245 = vpop.permute.xlu0 %1244
  %v1247 = vsel %vm251, %v1245, 0
  %1249 = vmatprep.subr.bf16.mxu0 0
  %1250 = vmatpush1.bf16.msra.mxu0 %v1091
  %1251 = vmatprep.subr.bf16.mxu0 0
  %1252 = vmatpush1.bf16.msra.mxu0 %v1092
  %1253 = vmatprep.subr.bf16.mxu0 0
  %1254 = vmatpush1.bf16.msra.mxu0 0
  %1255 = vmatprep.subr.bf16.mxu0 0
  %1256 = vmatpush1.bf16.msra.mxu0 0
  %1257 = vmatprep.subr.bf16.mxu0 0
  %1258 = vmatpush1.bf16.msra.mxu0 0
  %1259 = vmatprep.subr.bf16.mxu0 0
  %1260 = vmatpush1.bf16.msra.mxu0 0
  %1261 = vmatprep.subr.bf16.mxu0 0
  %1262 = vmatpush1.bf16.msra.mxu0 0
  %1263 = vmatprep.subr.bf16.mxu0 0
  %1264 = vmatpush1.bf16.msra.mxu0 0
  %1265 = vmatprep.subr.bf16.mxu0 0
  %1266 = vmatpush1.bf16.msra.mxu0 0
  %1267 = vmatprep.subr.bf16.mxu0 0
  %1268 = vmatpush1.bf16.msra.mxu0 0
  %1269 = vmatprep.subr.bf16.mxu0 0
  %1270 = vmatpush1.bf16.msra.mxu0 0
  %1271 = vmatprep.subr.bf16.mxu0 0
  %1272 = vmatpush1.bf16.msra.mxu0 0
  %1273 = vmatprep.subr.bf16.mxu0 0
  %1274 = vmatpush1.bf16.msra.mxu0 0
  %1275 = vmatprep.subr.bf16.mxu0 0
  %1276 = vmatpush1.bf16.msra.mxu0 0
  %1277 = vmatprep.subr.bf16.mxu0 0
  %1278 = vmatpush1.bf16.msra.mxu0 0
  %1279 = vmatprep.subr.bf16.mxu0 0
  %1280 = vmatpush1.bf16.msra.mxu0 0
  %1281 = vmatprep.mubr.bf16.mxu0 0
  %1282 = vmatmul.mubr.bf16.gmra.mrb[0].mxu0 %v1247
  %v1283 = vpop.f32.mrb[0].mxu0
  %v1284 = vadd.f32 0.0, %v1283
  %v1285 = vpop.f32.mrb[0].mxu0
  %v1286 = vpop.f32.mrb[0].mxu0
  %v1287 = vpop.f32.mrb[0].mxu0
  %1288 = vdwg.mxu0
  %v1289 = vadd.f32 %v1086, %v1284
  %v1290 = vxor.u32 %v1289, 2147483648
  %v1291 = vmul.f32 %v1290, 1.442695
  %v1292 = vpow.pop %v1291
  %v1293 = vadd.f32 %v1292, 1.0
  %v1294 = vrcp.pop %v1293
  %v1295 = vmul.f32 1.0, %v1294
  %v1296 = vmul.f32 %v1295, 2.0
  %v1297 = vsub.f32 %v1296, 1.0
  %v1298 = vmul.f32 %v1295, %v1230
  %1300 = vrot.lane.b32.xlu0 %v1297, 64
  %v1301 = vpop.permute.xlu0 %1300
  %v1303 = vmul.f32 %v1295, %v1301
  %1305 = vrot.lane.b32.xlu0 %v1303, 32
  %v1306 = vpop.permute.xlu0 %1305
  %v1308 = vadd.f32 %v1298, %v1306
  %v1309 = vtanh.pop %v1308
  %1311 = vrot.lane.b32.xlu0 %v1309, 64
  %v1312 = vpop.permute.xlu0 %1311
  %v1314 = vmul.f32 %v1295, %v1312
  %1316 = vrot.lane.b32.xlu0 %v1314, 32
  %v1317 = vpop.permute.xlu0 %1316
  %1319 = vst.msk [vmem:[#allocation2 + $0x10] sm:$0xff] %vm251, %v1317
  %v1320 = vpack.c.bf16 %v1314, %v1314
  %1322 = vrot.lane.b32.xlu0 %v1320, 32
  %v1323 = vpop.permute.xlu0 %1322
  %v1325 = vsel %vm251, %v1323, 0
  %1327 = vmatprep.subr.bf16.mxu0 0
  %1328 = vmatpush1.bf16.msra.mxu0 %v1091
  %1329 = vmatprep.subr.bf16.mxu0 0
  %1330 = vmatpush1.bf16.msra.mxu0 %v1092
  %1331 = vmatprep.subr.bf16.mxu0 0
  %1332 = vmatpush1.bf16.msra.mxu0 0
  %1333 = vmatprep.subr.bf16.mxu0 0
  %1334 = vmatpush1.bf16.msra.mxu0 0
  %1335 = vmatprep.subr.bf16.mxu0 0
  %1336 = vmatpush1.bf16.msra.mxu0 0
  %1337 = vmatprep.subr.bf16.mxu0 0
  %1338 = vmatpush1.bf16.msra.mxu0 0
  %1339 = vmatprep.subr.bf16.mxu0 0
  %1340 = vmatpush1.bf16.msra.mxu0 0
  %1341 = vmatprep.subr.bf16.mxu0 0
  %1342 = vmatpush1.bf16.msra.mxu0 0
  %1343 = vmatprep.subr.bf16.mxu0 0
  %1344 = vmatpush1.bf16.msra.mxu0 0
  %1345 = vmatprep.subr.bf16.mxu0 0
  %1346 = vmatpush1.bf16.msra.mxu0 0
  %1347 = vmatprep.subr.bf16.mxu0 0
  %1348 = vmatpush1.bf16.msra.mxu0 0
  %1349 = vmatprep.subr.bf16.mxu0 0
  %1350 = vmatpush1.bf16.msra.mxu0 0
  %1351 = vmatprep.subr.bf16.mxu0 0
  %1352 = vmatpush1.bf16.msra.mxu0 0
  %1353 = vmatprep.subr.bf16.mxu0 0
  %1354 = vmatpush1.bf16.msra.mxu0 0
  %1355 = vmatprep.subr.bf16.mxu0 0
  %1356 = vmatpush1.bf16.msra.mxu0 0
  %1357 = vmatprep.subr.bf16.mxu0 0
  %1358 = vmatpush1.bf16.msra.mxu0 0
  %1359 = vmatprep.mubr.bf16.mxu0 0
  %1360 = vmatmul.mubr.bf16.gmra.mrb[0].mxu0 %v1325
  %v1361 = vpop.f32.mrb[0].mxu0
  %v1362 = vadd.f32 0.0, %v1361
  %v1363 = vpop.f32.mrb[0].mxu0
  %v1364 = vpop.f32.mrb[0].mxu0
  %v1365 = vpop.f32.mrb[0].mxu0
  %1366 = vdwg.mxu0
  %v1367 = vadd.f32 %v1086, %v1362
  %v1368 = vxor.u32 %v1367, 2147483648
  %v1369 = vmul.f32 %v1368, 1.442695
  %v1370 = vpow.pop %v1369
  %v1371 = vadd.f32 %v1370, 1.0
  %v1372 = vrcp.pop %v1371
  %v1373 = vmul.f32 1.0, %v1372
  %v1374 = vmul.f32 %v1373, 2.0
  %v1375 = vsub.f32 %v1374, 1.0
  %v1376 = vmul.f32 %v1373, %v1308
  %1378 = vrot.lane.b32.xlu0 %v1375, 64
  %v1379 = vpop.permute.xlu0 %1378
  %v1381 = vmul.f32 %v1373, %v1379
  %1383 = vrot.lane.b32.xlu0 %v1381, 32
  %v1384 = vpop.permute.xlu0 %1383
  %v1386 = vadd.f32 %v1376, %v1384
  %v1387 = vtanh.pop %v1386
  %1389 = vrot.lane.b32.xlu0 %v1387, 64
  %v1390 = vpop.permute.xlu0 %1389
  %v1392 = vmul.f32 %v1373, %v1390
  %1394 = vrot.lane.b32.xlu0 %v1392, 32
  %v1395 = vpop.permute.xlu0 %1394
  %1397 = vst.msk [vmem:[#allocation2 + $0x18] sm:$0xff] %vm251, %v1395
  %v1398 = vpack.c.bf16 %v1392, %v1392
  %1400 = vrot.lane.b32.xlu0 %v1398, 32
  %v1401 = vpop.permute.xlu0 %1400
  %v1403 = vsel %vm251, %v1401, 0
  %1405 = vmatprep.subr.bf16.mxu0 0
  %1406 = vmatpush1.bf16.msra.mxu0 %v1091
  %1407 = vmatprep.subr.bf16.mxu0 0
  %1408 = vmatpush1.bf16.msra.mxu0 %v1092
  %1409 = vmatprep.subr.bf16.mxu0 0
  %1410 = vmatpush1.bf16.msra.mxu0 0
  %1411 = vmatprep.subr.bf16.mxu0 0
  %1412 = vmatpush1.bf16.msra.mxu0 0
  %1413 = vmatprep.subr.bf16.mxu0 0
  %1414 = vmatpush1.bf16.msra.mxu0 0
  %1415 = vmatprep.subr.bf16.mxu0 0
  %1416 = vmatpush1.bf16.msra.mxu0 0
  %1417 = vmatprep.subr.bf16.mxu0 0
  %1418 = vmatpush1.bf16.msra.mxu0 0
  %1419 = vmatprep.subr.bf16.mxu0 0
  %1420 = vmatpush1.bf16.msra.mxu0 0
  %1421 = vmatprep.subr.bf16.mxu0 0
  %1422 = vmatpush1.bf16.msra.mxu0 0
  %1423 = vmatprep.subr.bf16.mxu0 0
  %1424 = vmatpush1.bf16.msra.mxu0 0
  %1425 = vmatprep.subr.bf16.mxu0 0
  %1426 = vmatpush1.bf16.msra.mxu0 0
  %1427 = vmatprep.subr.bf16.mxu0 0
  %1428 = vmatpush1.bf16.msra.mxu0 0
  %1429 = vmatprep.subr.bf16.mxu0 0
  %1430 = vmatpush1.bf16.msra.mxu0 0
  %1431 = vmatprep.subr.bf16.mxu0 0
  %1432 = vmatpush1.bf16.msra.mxu0 0
  %1433 = vmatprep.subr.bf16.mxu0 0
  %1434 = vmatpush1.bf16.msra.mxu0 0
  %1435 = vmatprep.subr.bf16.mxu0 0
  %1436 = vmatpush1.bf16.msra.mxu0 0
  %1437 = vmatprep.mubr.bf16.mxu0 0
  %1438 = vmatmul.mubr.bf16.gmra.mrb[0].mxu0 %v1403
  %v1439 = vpop.f32.mrb[0].mxu0
  %v1440 = vadd.f32 0.0, %v1439
  %v1441 = vpop.f32.mrb[0].mxu0
  %v1442 = vpop.f32.mrb[0].mxu0
  %v1443 = vpop.f32.mrb[0].mxu0
  %1444 = vdwg.mxu0
  %v1445 = vadd.f32 %v1086, %v1440
  %v1446 = vxor.u32 %v1445, 2147483648
  %v1447 = vmul.f32 %v1446, 1.442695
  %v1448 = vpow.pop %v1447
  %v1449 = vadd.f32 %v1448, 1.0
  %v1450 = vrcp.pop %v1449
  %v1451 = vmul.f32 1.0, %v1450
  %v1452 = vmul.f32 %v1451, 2.0
  %v1453 = vsub.f32 %v1452, 1.0
  %v1454 = vmul.f32 %v1451, %v1386
  %1456 = vrot.lane.b32.xlu0 %v1453, 64
  %v1457 = vpop.permute.xlu0 %1456
  %v1459 = vmul.f32 %v1451, %v1457
  %1461 = vrot.lane.b32.xlu0 %v1459, 32
  %v1462 = vpop.permute.xlu0 %1461
  %v1464 = vadd.f32 %v1454, %v1462
  %v1465 = vtanh.pop %v1464
  %1467 = vrot.lane.b32.xlu0 %v1465, 64
  %v1468 = vpop.permute.xlu0 %1467
  %v1470 = vmul.f32 %v1451, %v1468
  %1472 = vrot.lane.b32.xlu0 %v1470, 32
  %v1473 = vpop.permute.xlu0 %1472
  %1475 = vst.msk [vmem:[#allocation2 + $0x20] sm:$0xff] %vm251, %v1473
  %v1476 = vpack.c.bf16 %v1470, %v1470
  %1478 = vrot.lane.b32.xlu0 %v1476, 32
  %v1479 = vpop.permute.xlu0 %1478
  %v1481 = vsel %vm251, %v1479, 0
  %1483 = vmatprep.subr.bf16.mxu0 0
  %1484 = vmatpush1.bf16.msra.mxu0 %v1091
  %1485 = vmatprep.subr.bf16.mxu0 0
  %1486 = vmatpush1.bf16.msra.mxu0 %v1092
  %1487 = vmatprep.subr.bf16.mxu0 0
  %1488 = vmatpush1.bf16.msra.mxu0 0
  %1489 = vmatprep.subr.bf16.mxu0 0
  %1490 = vmatpush1.bf16.msra.mxu0 0
  %1491 = vmatprep.subr.bf16.mxu0 0
  %1492 = vmatpush1.bf16.msra.mxu0 0
  %1493 = vmatprep.subr.bf16.mxu0 0
  %1494 = vmatpush1.bf16.msra.mxu0 0
  %1495 = vmatprep.subr.bf16.mxu0 0
  %1496 = vmatpush1.bf16.msra.mxu0 0
  %1497 = vmatprep.subr.bf16.mxu0 0
  %1498 = vmatpush1.bf16.msra.mxu0 0
  %1499 = vmatprep.subr.bf16.mxu0 0
  %1500 = vmatpush1.bf16.msra.mxu0 0
  %1501 = vmatprep.subr.bf16.mxu0 0
  %1502 = vmatpush1.bf16.msra.mxu0 0
  %1503 = vmatprep.subr.bf16.mxu0 0
  %1504 = vmatpush1.bf16.msra.mxu0 0
  %1505 = vmatprep.subr.bf16.mxu0 0
  %1506 = vmatpush1.bf16.msra.mxu0 0
  %1507 = vmatprep.subr.bf16.mxu0 0
  %1508 = vmatpush1.bf16.msra.mxu0 0
  %1509 = vmatprep.subr.bf16.mxu0 0
  %1510 = vmatpush1.bf16.msra.mxu0 0
  %1511 = vmatprep.subr.bf16.mxu0 0
  %1512 = vmatpush1.bf16.msra.mxu0 0
  %1513 = vmatprep.subr.bf16.mxu0 0
  %1514 = vmatpush1.bf16.msra.mxu0 0
  %1515 = vmatprep.mubr.bf16.mxu0 0
  %1516 = vmatmul.mubr.bf16.gmra.mrb[0].mxu0 %v1481
  %v1517 = vpop.f32.mrb[0].mxu0
  %v1518 = vadd.f32 0.0, %v1517
  %v1519 = vpop.f32.mrb[0].mxu0
  %v1520 = vpop.f32.mrb[0].mxu0
  %v1521 = vpop.f32.mrb[0].mxu0
  %1522 = vdwg.mxu0
  %v1523 = vadd.f32 %v1086, %v1518
  %v1524 = vxor.u32 %v1523, 2147483648
  %v1525 = vmul.f32 %v1524, 1.442695
  %v1526 = vpow.pop %v1525
  %v1527 = vadd.f32 %v1526, 1.0
  %v1528 = vrcp.pop %v1527
  %v1529 = vmul.f32 1.0, %v1528
  %v1530 = vmul.f32 %v1529, 2.0
  %v1531 = vsub.f32 %v1530, 1.0
  %v1532 = vmul.f32 %v1529, %v1464
  %1534 = vrot.lane.b32.xlu0 %v1531, 64
  %v1535 = vpop.permute.xlu0 %1534
  %v1537 = vmul.f32 %v1529, %v1535
  %1539 = vrot.lane.b32.xlu0 %v1537, 32
  %v1540 = vpop.permute.xlu0 %1539
  %v1542 = vadd.f32 %v1532, %v1540
  %v1543 = vtanh.pop %v1542
  %1545 = vrot.lane.b32.xlu0 %v1543, 64
  %v1546 = vpop.permute.xlu0 %1545
  %v1548 = vmul.f32 %v1529, %v1546
  %1550 = vrot.lane.b32.xlu0 %v1548, 32
  %v1551 = vpop.permute.xlu0 %1550
  %1553 = vst.msk [vmem:[#allocation2 + $0x28] sm:$0xff] %vm251, %v1551
  %v1554 = vpack.c.bf16 %v1548, %v1548
  %1556 = vrot.lane.b32.xlu0 %v1554, 32
  %v1557 = vpop.permute.xlu0 %1556
  %v1559 = vsel %vm251, %v1557, 0
  %1561 = vmatprep.subr.bf16.mxu0 0
  %1562 = vmatpush1.bf16.msra.mxu0 %v1091
  %1563 = vmatprep.subr.bf16.mxu0 0
  %1564 = vmatpush1.bf16.msra.mxu0 %v1092
  %1565 = vmatprep.subr.bf16.mxu0 0
  %1566 = vmatpush1.bf16.msra.mxu0 0
  %1567 = vmatprep.subr.bf16.mxu0 0
  %1568 = vmatpush1.bf16.msra.mxu0 0
  %1569 = vmatprep.subr.bf16.mxu0 0
  %1570 = vmatpush1.bf16.msra.mxu0 0
  %1571 = vmatprep.subr.bf16.mxu0 0
  %1572 = vmatpush1.bf16.msra.mxu0 0
  %1573 = vmatprep.subr.bf16.mxu0 0
  %1574 = vmatpush1.bf16.msra.mxu0 0
  %1575 = vmatprep.subr.bf16.mxu0 0
  %1576 = vmatpush1.bf16.msra.mxu0 0
  %1577 = vmatprep.subr.bf16.mxu0 0
  %1578 = vmatpush1.bf16.msra.mxu0 0
  %1579 = vmatprep.subr.bf16.mxu0 0
  %1580 = vmatpush1.bf16.msra.mxu0 0
  %1581 = vmatprep.subr.bf16.mxu0 0
  %1582 = vmatpush1.bf16.msra.mxu0 0
  %1583 = vmatprep.subr.bf16.mxu0 0
  %1584 = vmatpush1.bf16.msra.mxu0 0
  %1585 = vmatprep.subr.bf16.mxu0 0
  %1586 = vmatpush1.bf16.msra.mxu0 0
  %1587 = vmatprep.subr.bf16.mxu0 0
  %1588 = vmatpush1.bf16.msra.mxu0 0
  %1589 = vmatprep.subr.bf16.mxu0 0
  %1590 = vmatpush1.bf16.msra.mxu0 0
  %1591 = vmatprep.subr.bf16.mxu0 0
  %1592 = vmatpush1.bf16.msra.mxu0 0
  %1593 = vmatprep.mubr.bf16.mxu0 0
  %1594 = vmatmul.mubr.bf16.gmra.mrb[0].mxu0 %v1559
  %v1595 = vpop.f32.mrb[0].mxu0
  %v1596 = vadd.f32 0.0, %v1595
  %v1597 = vpop.f32.mrb[0].mxu0
  %v1598 = vpop.f32.mrb[0].mxu0
  %v1599 = vpop.f32.mrb[0].mxu0
  %1600 = vdwg.mxu0
  %v1601 = vadd.f32 %v1086, %v1596
  %v1602 = vxor.u32 %v1601, 2147483648
  %v1603 = vmul.f32 %v1602, 1.442695
  %v1604 = vpow.pop %v1603
  %v1605 = vadd.f32 %v1604, 1.0
  %v1606 = vrcp.pop %v1605
  %v1607 = vmul.f32 1.0, %v1606
  %v1608 = vmul.f32 %v1607, 2.0
  %v1609 = vsub.f32 %v1608, 1.0
  %v1610 = vmul.f32 %v1607, %v1542
  %1612 = vrot.lane.b32.xlu0 %v1609, 64
  %v1613 = vpop.permute.xlu0 %1612
  %v1615 = vmul.f32 %v1607, %v1613
  %1617 = vrot.lane.b32.xlu0 %v1615, 32
  %v1618 = vpop.permute.xlu0 %1617
  %v1620 = vadd.f32 %v1610, %v1618
  %v1621 = vtanh.pop %v1620
  %1623 = vrot.lane.b32.xlu0 %v1621, 64
  %v1624 = vpop.permute.xlu0 %1623
  %v1626 = vmul.f32 %v1607, %v1624
  %1628 = vrot.lane.b32.xlu0 %v1626, 32
  %v1629 = vpop.permute.xlu0 %1628
  %1631 = vst.msk [vmem:[#allocation2 + $0x30] sm:$0xff] %vm251, %v1629
  %v1632 = vpack.c.bf16 %v1626, %v1626
  %1634 = vrot.lane.b32.xlu0 %v1632, 32
  %v1635 = vpop.permute.xlu0 %1634
  %v1637 = vsel %vm251, %v1635, 0
  %1639 = vmatprep.subr.bf16.mxu0 0
  %1640 = vmatpush1.bf16.msra.mxu0 %v1091
  %1641 = vmatprep.subr.bf16.mxu0 0
  %1642 = vmatpush1.bf16.msra.mxu0 %v1092
  %1643 = vmatprep.subr.bf16.mxu0 0
  %1644 = vmatpush1.bf16.msra.mxu0 0
  %1645 = vmatprep.subr.bf16.mxu0 0
  %1646 = vmatpush1.bf16.msra.mxu0 0
  %1647 = vmatprep.subr.bf16.mxu0 0
  %1648 = vmatpush1.bf16.msra.mxu0 0
  %1649 = vmatprep.subr.bf16.mxu0 0
  %1650 = vmatpush1.bf16.msra.mxu0 0
  %1651 = vmatprep.subr.bf16.mxu0 0
  %1652 = vmatpush1.bf16.msra.mxu0 0
  %1653 = vmatprep.subr.bf16.mxu0 0
  %1654 = vmatpush1.bf16.msra.mxu0 0
  %1655 = vmatprep.subr.bf16.mxu0 0
  %1656 = vmatpush1.bf16.msra.mxu0 0
  %1657 = vmatprep.subr.bf16.mxu0 0
  %1658 = vmatpush1.bf16.msra.mxu0 0
  %1659 = vmatprep.subr.bf16.mxu0 0
  %1660 = vmatpush1.bf16.msra.mxu0 0
  %1661 = vmatprep.subr.bf16.mxu0 0
  %1662 = vmatpush1.bf16.msra.mxu0 0
  %1663 = vmatprep.subr.bf16.mxu0 0
  %1664 = vmatpush1.bf16.msra.mxu0 0
  %1665 = vmatprep.subr.bf16.mxu0 0
  %1666 = vmatpush1.bf16.msra.mxu0 0
  %1667 = vmatprep.subr.bf16.mxu0 0
  %1668 = vmatpush1.bf16.msra.mxu0 0
  %1669 = vmatprep.subr.bf16.mxu0 0
  %1670 = vmatpush1.bf16.msra.mxu0 0
  %1671 = vmatprep.mubr.bf16.mxu0 0
  %1672 = vmatmul.mubr.bf16.gmra.mrb[0].mxu0 %v1637
  %v1673 = vpop.f32.mrb[0].mxu0
  %v1674 = vadd.f32 0.0, %v1673
  %v1675 = vpop.f32.mrb[0].mxu0
  %v1676 = vpop.f32.mrb[0].mxu0
  %v1677 = vpop.f32.mrb[0].mxu0
  %1678 = vdwg.mxu0
  %v1679 = vadd.f32 %v1086, %v1674
  %v1680 = vxor.u32 %v1679, 2147483648
  %v1681 = vmul.f32 %v1680, 1.442695
  %v1682 = vpow.pop %v1681
  %v1683 = vadd.f32 %v1682, 1.0
  %v1684 = vrcp.pop %v1683
  %v1685 = vmul.f32 1.0, %v1684
  %v1686 = vmul.f32 %v1685, 2.0
  %v1687 = vsub.f32 %v1686, 1.0
  %v1688 = vmul.f32 %v1685, %v1620
  %1690 = vrot.lane.b32.xlu0 %v1687, 64
  %v1691 = vpop.permute.xlu0 %1690
  %v1693 = vmul.f32 %v1685, %v1691
  %1695 = vrot.lane.b32.xlu0 %v1693, 32
  %v1696 = vpop.permute.xlu0 %1695
  %v1698 = vadd.f32 %v1688, %v1696
  %v1699 = vtanh.pop %v1698
  %1701 = vrot.lane.b32.xlu0 %v1699, 64
  %v1702 = vpop.permute.xlu0 %1701
  %v1704 = vmul.f32 %v1685, %v1702
  %1706 = vrot.lane.b32.xlu0 %v1704, 32
  %v1707 = vpop.permute.xlu0 %1706
  %1709 = vst.msk [vmem:[#allocation2 + $0x38] sm:$0xff] %vm251, %v1707
  %v1710 = vld [vmem:[#allocation2] sm:$0xff]
  %v1711 = vld [vmem:[#allocation2 + $0x8] sm:$0xff]
  %v1712 = vld [vmem:[#allocation2 + $0x10] sm:$0xff]
  %v1713 = vld [vmem:[#allocation2 + $0x18] sm:$0xff]
  %v1714 = vld [vmem:[#allocation2 + $0x20] sm:$0xff]
  %v1715 = vld [vmem:[#allocation2 + $0x28] sm:$0xff]
  %v1716 = vld [vmem:[#allocation2 + $0x30] sm:$0xff]
  %v1717 = vld [vmem:[#allocation2 + $0x38] sm:$0xff]
  %v1718 = vld [vmem:[%s3 + $0xa0] sm:$0xff]
  %v1719 = vld [vmem:[%s3 + $0xa8] sm:$0xff]
  %v1720 = vld [vmem:[%s3 + $0xb0] sm:$0xff]
  %v1721 = vld [vmem:[%s3 + $0xb8] sm:$0xff]
  %v1722 = vld [vmem:[%s3 + $0xc0] sm:$0x1]
  %v1723 = vlaneseq
  %v1724 = vshrl.u32 %v1723, 7
  %v1725 = vsub.s32 0, %v1724
  %v1726 = vrot.slane %v1722, %v1725
  %v1728 = vsel %vm251, %v1710, 0
  %v1731 = vsel %vm251, %v1711, 0
  %v1734 = vsel %vm251, %v1712, 0
  %v1737 = vsel %vm251, %v1713, 0
  %v1740 = vsel %vm251, %v1714, 0
  %v1743 = vsel %vm251, %v1715, 0
  %v1746 = vsel %vm251, %v1716, 0
  %v1749 = vsel %vm251, %v1717, 0
  %1751 = vmatprep.subr.mxu0 0.0
  %1752 = vmatpush1.msra.mxu0 %v1718
  %1753 = vmatprep.subr.mxu0 0.0
  %1754 = vmatpush1.msra.mxu0 %v1719
  %1755 = vmatprep.subr.mxu0 0.0
  %1756 = vmatpush1.msra.mxu0 %v1720
  %1757 = vmatprep.subr.mxu0 0.0
  %1758 = vmatpush1.msra.mxu0 %v1721
  %1759 = vmatprep.subr.mxu0 0.0
  %1760 = vmatpush1.msra.mxu0 0.0
  %1761 = vmatprep.subr.mxu0 0.0
  %1762 = vmatpush1.msra.mxu0 0.0
  %1763 = vmatprep.subr.mxu0 0.0
  %1764 = vmatpush1.msra.mxu0 0.0
  %1765 = vmatprep.subr.mxu0 0.0
  %1766 = vmatpush1.msra.mxu0 0.0
  %1767 = vmatprep.subr.mxu0 0.0
  %1768 = vmatpush1.msra.mxu0 0.0
  %1769 = vmatprep.subr.mxu0 0.0
  %1770 = vmatpush1.msra.mxu0 0.0
  %1771 = vmatprep.subr.mxu0 0.0
  %1772 = vmatpush1.msra.mxu0 0.0
  %1773 = vmatprep.subr.mxu0 0.0
  %1774 = vmatpush1.msra.mxu0 0.0
  %1775 = vmatprep.subr.mxu0 0.0
  %1776 = vmatpush1.msra.mxu0 0.0
  %1777 = vmatprep.subr.mxu0 0.0
  %1778 = vmatpush1.msra.mxu0 0.0
  %1779 = vmatprep.subr.mxu0 0.0
  %1780 = vmatpush1.msra.mxu0 0.0
  %1781 = vmatprep.subr.mxu0 0.0
  %1782 = vmatpush1.msra.mxu0 0.0
  %1783 = vmatprep.subr.mxu0 0.0
  %1784 = vmatpush1.msra.mxu0 0.0
  %1785 = vmatprep.subr.mxu0 0.0
  %1786 = vmatpush1.msra.mxu0 0.0
  %1787 = vmatprep.subr.mxu0 0.0
  %1788 = vmatpush1.msra.mxu0 0.0
  %1789 = vmatprep.subr.mxu0 0.0
  %1790 = vmatpush1.msra.mxu0 0.0
  %1791 = vmatprep.subr.mxu0 0.0
  %1792 = vmatpush1.msra.mxu0 0.0
  %1793 = vmatprep.subr.mxu0 0.0
  %1794 = vmatpush1.msra.mxu0 0.0
  %1795 = vmatprep.subr.mxu0 0.0
  %1796 = vmatpush1.msra.mxu0 0.0
  %1797 = vmatprep.subr.mxu0 0.0
  %1798 = vmatpush1.msra.mxu0 0.0
  %1799 = vmatprep.subr.mxu0 0.0
  %1800 = vmatpush1.msra.mxu0 0.0
  %1801 = vmatprep.subr.mxu0 0.0
  %1802 = vmatpush1.msra.mxu0 0.0
  %1803 = vmatprep.subr.mxu0 0.0
  %1804 = vmatpush1.msra.mxu0 0.0
  %1805 = vmatprep.subr.mxu0 0.0
  %1806 = vmatpush1.msra.mxu0 0.0
  %1807 = vmatprep.subr.mxu0 0.0
  %1808 = vmatpush1.msra.mxu0 0.0
  %1809 = vmatprep.subr.mxu0 0.0
  %1810 = vmatpush1.msra.mxu0 0.0
  %1811 = vmatprep.subr.mxu0 0.0
  %1812 = vmatpush1.msra.mxu0 0.0
  %1813 = vmatprep.subr.mxu0 0.0
  %1814 = vmatpush1.msra.mxu0 0.0
  %1815 = vmatprep.mubr.f32.mxu0 0.0
  %1816 = vmatmul.mubr.f32.gmra.mrb[0].mxu0 %v1728
  %v1817 = vpop.f32.mrb[0].mxu0
  %v1818 = vadd.f32 %v1726, %v1817
  %v1819 = vpop.f32.mrb[0].mxu0
  %1820 = vmatprep.mubr.f32.mxu0 0.0
  %1821 = vmatmul.mubr.f32.gmra.mrb[0].mxu0 %v1731
  %v1822 = vpop.f32.mrb[0].mxu0
  %v1823 = vadd.f32 %v1726, %v1822
  %v1824 = vpop.f32.mrb[0].mxu0
  %1825 = vmatprep.mubr.f32.mxu0 0.0
  %1826 = vmatmul.mubr.f32.gmra.mrb[0].mxu0 %v1734
  %v1827 = vpop.f32.mrb[0].mxu0
  %v1828 = vadd.f32 %v1726, %v1827
  %v1829 = vpop.f32.mrb[0].mxu0
  %1830 = vmatprep.mubr.f32.mxu0 0.0
  %1831 = vmatmul.mubr.f32.gmra.mrb[0].mxu0 %v1737
  %v1832 = vpop.f32.mrb[0].mxu0
  %v1833 = vadd.f32 %v1726, %v1832
  %v1834 = vpop.f32.mrb[0].mxu0
  %1835 = vmatprep.mubr.f32.mxu0 0.0
  %1836 = vmatmul.mubr.f32.gmra.mrb[0].mxu0 %v1740
  %v1837 = vpop.f32.mrb[0].mxu0
  %v1838 = vadd.f32 %v1726, %v1837
  %v1839 = vpop.f32.mrb[0].mxu0
  %1840 = vmatprep.mubr.f32.mxu0 0.0
  %1841 = vmatmul.mubr.f32.gmra.mrb[0].mxu0 %v1743
  %v1842 = vpop.f32.mrb[0].mxu0
  %v1843 = vadd.f32 %v1726, %v1842
  %v1844 = vpop.f32.mrb[0].mxu0
  %1845 = vmatprep.mubr.f32.mxu0 0.0
  %1846 = vmatmul.mubr.f32.gmra.mrb[0].mxu0 %v1746
  %v1847 = vpop.f32.mrb[0].mxu0
  %v1848 = vadd.f32 %v1726, %v1847
  %v1849 = vpop.f32.mrb[0].mxu0
  %1850 = vmatprep.mubr.f32.mxu0 0.0
  %1851 = vmatmul.mubr.f32.gmra.mrb[0].mxu0 %v1749
  %v1852 = vpop.f32.mrb[0].mxu0
  %v1853 = vadd.f32 %v1726, %v1852
  %v1854 = vpop.f32.mrb[0].mxu0
  %1855 = vdwg.mxu0
  %1856 = vst [vmem:[%s4] sm:$0xff] %v1818
  %1857 = vst [vmem:[%s4 + $0x8] sm:$0xff] %v1823
  %1858 = vst [vmem:[%s4 + $0x10] sm:$0xff] %v1828
  %1859 = vst [vmem:[%s4 + $0x18] sm:$0xff] %v1833
  %1860 = vst [vmem:[%s4 + $0x20] sm:$0xff] %v1838
  %1861 = vst [vmem:[%s4 + $0x28] sm:$0xff] %v1843
  %1862 = vst [vmem:[%s4 + $0x30] sm:$0xff] %v1848
  %1863 = vst [vmem:[%s4 + $0x38] sm:$0xff] %v1853
  // Predicated region
  $region18: #{handwriting_forward.1} parent=0 // pred_check
    _
  $region19: #{handwriting_forward.1} parent=0 // pred_check_branch
    %1865 = sbr.rel (0) target = $region21
  $region20: #{handwriting_forward.1} parent=0 // pred_region
    _
  $region21: #{handwriting_forward.1} parent=0 // pred_fallthru
    _
  // Predicated region
  $region22: #{handwriting_forward.1} parent=0 // pred_check
    _
  $region23: #{handwriting_forward.1} parent=0 // pred_check_branch
    %1867 = sbr.rel (0) target = $region25
  $region24: #{handwriting_forward.1} parent=0 // pred_region
    _
  $region25: #{handwriting_forward.1} parent=0 // pred_fallthru
    _
  // Predicated region
  $region26: #{handwriting_forward.1} parent=0 // pred_check
    _
  $region27: #{handwriting_forward.1} parent=0 // pred_check_branch
    %1869 = sbr.rel (0) target = $region29
  $region28: #{handwriting_forward.1} parent=0 // pred_region
    _
  $region29: #{handwriting_forward.1} parent=0 // pred_fallthru
    _
  // Predicated region
  $region30: #{handwriting_forward.1} parent=0 // pred_check
    _
  $region31: #{handwriting_forward.1} parent=0 // pred_check_branch
    %1871 = sbr.rel (0) target = $region33
  $region32: #{handwriting_forward.1} parent=0 // pred_region
    _
  $region33: #{handwriting_forward.1} parent=0 // pred_fallthru
    _

</llo_original>
